<compile_context>
chip_gen: v5e
topology: v5e:2x2
jax: 0.10.0
libtpu: 0.0.40
codegen_flags: <defaults>
</compile_context>

<pallas_src>
import numpy as np
import jax
import jax.numpy as jnp
from jax.experimental import pallas as pl
from jax.experimental.pallas import tpu as pltpu

LANE = 128
SUBLANE = 8


def _round_up(x, m):
    return ((int(x) + m - 1) // m) * m


def _pad2(a, rows, cols):
    a = np.asarray(a, np.float64)
    out = np.zeros((rows, cols), np.float64)
    out[: a.shape[0], : a.shape[1]] = a
    return out


def _default_tile_n():
    # 256-row LHS fills the 2x256x256 MXUs on v6e/v7x; v5e's 4x128x128 MXU matches 128.
    try:
        kind = jax.devices()[0].device_kind.lower()
    except Exception:
        return 128
    if ('v2' in kind) or ('v3' in kind) or ('v4' in kind) or ('v5' in kind):
        return 128
    return 256


# ------------------------------------------------------------------
# One-time graph preprocessing (hoisted out of the ODE RHS)
# ------------------------------------------------------------------
def preprocess_graph(ei_int, ei_bound, ei_ctrl, boundary_node_index, control_node_index,
                     n_int):
    ei_int = np.asarray(ei_int)
    ei_bound = np.asarray(ei_bound)
    ei_ctrl = np.asarray(ei_ctrl)
    # same filter as torch: torch.isin(edge_index, node_index)[0] == src-row membership
    ei_bound = ei_bound[:, np.isin(ei_bound[0], np.asarray(boundary_node_index))]
    ei_ctrl = ei_ctrl[:, np.isin(ei_ctrl[0], np.asarray(control_node_index))]

    int_src, int_tgt = ei_int[0], ei_int[1]
    b_tgt = ei_bound[1]
    c_tgt = ei_ctrl[1]
    N = int(n_int)
    Eb, Ec = int(b_tgt.shape[0]), int(c_tgt.shape[0])

    d_i = np.bincount(int_tgt, minlength=N).astype(np.float64)
    d_b = np.bincount(b_tgt, minlength=N).astype(np.float64)
    d_c = np.bincount(c_tgt, minlength=N).astype(np.float64)
    cnt = d_i + d_b + d_c
    inv = np.where(cnt > 0, 1.0 / np.maximum(cnt, 1.0), 0.0)

    # MeanAggregation with dim_size = N (zero rows for nodes with no messages)
    A = np.zeros((N, N), np.float64)
    np.add.at(A, (int_tgt, int_src), 1.0)
    B = np.zeros((N, max(Eb, 1)), np.float64)
    if Eb:
        B[b_tgt, np.arange(Eb)] = 1.0
    C = np.zeros((N, max(Ec, 1)), np.float64)
    if Ec:
        C[c_tgt, np.arange(Ec)] = 1.0
    A *= inv[:, None]
    B *= inv[:, None]
    C *= inv[:, None]
    return dict(A=A, B=B, C=C,
                di=(d_i * inv)[:, None], db=(d_b * inv)[:, None], dc=(d_c * inv)[:, None],
                N=N, Eb=Eb, Ec=Ec)


# ------------------------------------------------------------------
# One-time parameter preprocessing + pallas_call construction
# ------------------------------------------------------------------
def prepare_diffop(graph, params1, params2, input_dim, control_dim, message_dim, hidden_dim,
                   tile_n=None, compute_dtype=jnp.bfloat16, operators_resident=None):
    cdt = compute_dtype
    dsize = np.dtype(cdt).itemsize
    N, Eb, Ec = graph['N'], graph['Eb'], graph['Ec']
    if tile_n is None:
        tile_n = _default_tile_n()
    TN = tile_n if N >= tile_n else _round_up(max(N, 1), SUBLANE)
    N_pad = _round_up(max(N, 1), TN)
    Eb_pad = _round_up(max(Eb, 1), SUBLANE)
    Ec_pad = _round_up(max(Ec, 1), SUBLANE)
    D1p = _round_up(input_dim, LANE)
    C1p = _round_up(control_dim, LANE)
    H1p = _round_up(hidden_dim, LANE)
    OUT1, OUT2 = H1p, D1p            # layer-1 / layer-2 output feature widths
    WMAX = max(OUT1, OUT2)

    def _norm(params):
        out = {}
        for k, v in params.items():
            a = np.asarray(v, np.float64)
            out[k] = a.reshape(1, -1) if a.ndim == 1 else a
        return out

    p1, p2 = _norm(params1), _norm(params2)
    di, db, dc = graph['di'], graph['db'], graph['dc']   # (N,1), 1/count folded in

    # ---- layer-1 weight folding (exact, done in float64) ----
    W1m = p1['W_im']
    Wa1 = p1['W_ii'][:input_dim] @ W1m          # src(int)  -> hidden
    Wb1 = p1['W_bi'][:input_dim] @ W1m          # src(bound)-> hidden
    Wc1 = p1['W_ci'][:control_dim] @ W1m        # src(ctrl) -> hidden
    Wcat1 = np.hstack([_pad2(p1['W_ii'][input_dim:] @ W1m, D1p, OUT1),
                       _pad2(p1['W_bi'][input_dim:] @ W1m, D1p, OUT1),
                       _pad2(p1['W_ci'][control_dim:] @ W1m, D1p, OUT1),
                       _pad2(p1['W_is'], D1p, OUT1)])
    nb1 = (di @ p1['b_ii'] + db @ p1['b_bi'] + dc @ p1['b_ci']) @ W1m + p1['b_im'] + p1['b_is']
    Wbd1 = p1['W_bs'] + (p1['W_bb'][:input_dim] + p1['W_bb'][input_dim:]) @ p1['W_bm']
    bbd1 = p1['b_bs'] + p1['b_bb'] @ p1['W_bm'] + p1['b_bm']
    Wct1 = p1['W_cs'] + (p1['W_cc'][:control_dim] + p1['W_cc'][control_dim:]) @ p1['W_cm']
    bct1 = p1['b_cs'] + p1['b_cc'] @ p1['W_cm'] + p1['b_cm']

    # ---- layer-2 (interior branch only; its boundary/control outputs are discarded) ----
    W2m = p2['W_im']
    Wa2 = p2['W_ii'][:hidden_dim] @ W2m
    Wb2 = p2['W_bi'][:hidden_dim] @ W2m
    Wc2 = p2['W_ci'][:hidden_dim] @ W2m
    Wcat2 = np.hstack([_pad2(p2['W_ii'][hidden_dim:] @ W2m, H1p, OUT2),
                       _pad2(p2['W_bi'][hidden_dim:] @ W2m, H1p, OUT2),
                       _pad2(p2['W_ci'][hidden_dim:] @ W2m, H1p, OUT2),
                       _pad2(p2['W_is'], H1p, OUT2)])
    nb2 = (di @ p2['b_ii'] + db @ p2['b_bi'] + dc @ p2['b_ci']) @ W2m + p2['b_im'] + p2['b_is']

    operands = dict(
        A=_pad2(graph['A'], N_pad, N_pad),
        B=_pad2(graph['B'], N_pad, Eb_pad),
        C=_pad2(graph['C'], N_pad, Ec_pad),
        d=_pad2(np.concatenate([di, db, dc], axis=1), N_pad, LANE),
        nb1=_pad2(nb1, N_pad, OUT1),
        nb2=_pad2(nb2, N_pad, OUT2),
        Wa1=_pad2(Wa1, D1p, OUT1), Wb1=_pad2(Wb1, D1p, OUT1), Wc1=_pad2(Wc1, C1p, OUT1),
        Wcat1=Wcat1,
        Wbd1=_pad2(Wbd1, D1p, OUT1), Wct1=_pad2(Wct1, C1p, OUT1),
        bbc1=_pad2(np.vstack([bbd1, bct1]), 2, OUT1),
        Wa2=_pad2(Wa2, H1p, OUT2), Wb2=_pad2(Wb2, H1p, OUT2), Wc2=_pad2(Wc2, H1p, OUT2),
        Wcat2=Wcat2,
    )
    gorder = ['A', 'B', 'C', 'd', 'nb1', 'nb2']
    worder = ['Wa1', 'Wb1', 'Wc1', 'Wcat1', 'Wbd1', 'Wct1', 'bbc1',
              'Wa2', 'Wb2', 'Wc2', 'Wcat2']

    # keep A/B/C resident in VMEM (fetched once) whenever they fit a conservative budget
    oper_res_bytes = dsize * N_pad * (N_pad + Eb_pad + Ec_pad)
    if operators_resident is None:
        operators_resident = oper_res_bytes <= (16 << 20)
    resident = bool(operators_resident)

    # ---- BlockSpecs ----
    def full_spec(shape):
        return pl.BlockSpec(tuple(int(s) for s in shape), lambda l, i: (0, 0))

    if resident:
        a_spec = full_spec((N_pad, N_pad))
        b_spec = full_spec((N_pad, Eb_pad))
        c_spec = full_spec((N_pad, Ec_pad))
    else:
        a_spec = pl.BlockSpec((TN, N_pad), lambda l, i: (i, 0))
        b_spec = pl.BlockSpec((TN, Eb_pad), lambda l, i: (i, 0))
        c_spec = pl.BlockSpec((TN, Ec_pad), lambda l, i: (i, 0))
    d_spec = pl.BlockSpec((TN, LANE), lambda l, i: (i, 0))
    # node biases are only DMA'd during their own layer phase (collapse to block 0 otherwise)
    nb1_spec = pl.BlockSpec((TN, OUT1), lambda l, i: (i * (1 - l), 0))
    nb2_spec = pl.BlockSpec((TN, OUT2), lambda l, i: (i * l, 0))
    act_specs = [full_spec((N_pad, D1p)), full_spec((Eb_pad, D1p)), full_spec((Ec_pad, C1p))]
    w_specs = [full_spec(operands[k].shape) for k in worder]
    in_specs = [a_spec, b_spec, c_spec, d_spec, nb1_spec, nb2_spec] + act_specs + w_specs
    # output only written in phase 1; phase-0 index collapses to block 0 (no garbage writebacks)
    out_spec = pl.BlockSpec((TN, OUT2), lambda l, i: (i * l, 0))

    # ---- the fused two-phase kernel ----
    def kernel(A_ref, B_ref, C_ref, d_ref, nb1_ref, nb2_ref,
               x_ref, xb_ref, u_ref,
               wa1_ref, wb1_ref, wc1_ref, wcat1_ref, wbd1_ref, wct1_ref, bbc1_ref,
               wa2_ref, wb2_ref, wc2_ref, wcat2_ref,
               dx_ref,
               h_int_ref, h_bnd_ref, h_u_ref, pn_ref, pb_ref, pc_ref):
        layer = pl.program_id(0)
        i = pl.program_id(1)
        row0 = pl.multiple_of(i * TN, TN)
        f32 = jnp.float32

        def mm(a, b):
            return jnp.dot(a, b, preferred_element_type=f32)

        def op_rows():
            if resident:
                return (A_ref[pl.ds(row0, TN), :],
                        B_ref[pl.ds(row0, TN), :],
                        C_ref[pl.ds(row0, TN), :])
            return A_ref[...], B_ref[...], C_ref[...]

        def scaled_tgt(t, out):
            # di*(x@Wtgt_ii) + db*(x@Wtgt_bi) + dc*(x@Wtgt_ci) + x@W_is  (fused matmul)
            return (d_ref[:, 0:1] * t[:, 0 * out:1 * out]
                    + d_ref[:, 1:2] * t[:, 1 * out:2 * out]
                    + d_ref[:, 2:3] * t[:, 2 * out:3 * out]
                    + t[:, 3 * out:4 * out])

        @pl.when(layer == 0)
        def _phase0():
            @pl.when(i == 0)
            def _hoist0():
                # block-invariant projections (W_im already folded into the weights)
                pn_ref[:, :OUT1] = mm(x_ref[...], wa1_ref[...]).astype(pn_ref.dtype)
                pb_ref[:, :OUT1] = mm(xb_ref[...], wb1_ref[...]).astype(pb_ref.dtype)
                pc_ref[:, :OUT1] = mm(u_ref[...], wc1_ref[...]).astype(pc_ref.dtype)
                # boundary / control self-updates collapsed to one matmul each
                h_bnd_ref[...] = (mm(xb_ref[...], wbd1_ref[...])
                                  + bbc1_ref[0:1, :]).astype(h_bnd_ref.dtype)
                h_u_ref[...] = (mm(u_ref[...], wct1_ref[...])
                                + bbc1_ref[1:2, :]).astype(h_u_ref.dtype)

            A_blk, B_blk, C_blk = op_rows()
            x_blk = x_ref[pl.ds(row0, TN), :]
            acc = scaled_tgt(mm(x_blk, wcat1_ref[...]), OUT1)
            acc += mm(A_blk, pn_ref[:, :OUT1])
            acc += mm(B_blk, pb_ref[:, :OUT1])
            acc += mm(C_blk, pc_ref[:, :OUT1])
            acc += nb1_ref[...]
            h_int_ref[pl.ds(row0, TN), :] = acc.astype(h_int_ref.dtype)

        @pl.when(layer == 1)
        def _phase1():
            @pl.when(i == 0)
            def _hoist1():
                pn_ref[:, :OUT2] = mm(h_int_ref[...], wa2_ref[...]).astype(pn_ref.dtype)
                pb_ref[:, :OUT2] = mm(h_bnd_ref[...], wb2_ref[...]).astype(pb_ref.dtype)
                pc_ref[:, :OUT2] = mm(h_u_ref[...], wc2_ref[...]).astype(pc_ref.dtype)

            A_blk, B_blk, C_blk = op_rows()
            h_blk = h_int_ref[pl.ds(row0, TN), :]
            out = scaled_tgt(mm(h_blk, wcat2_ref[...]), OUT2)
            out += mm(A_blk, pn_ref[:, :OUT2])
            out += mm(B_blk, pb_ref[:, :OUT2])
            out += mm(C_blk, pc_ref[:, :OUT2])
            out += nb2_ref[...]
            dx_ref[...] = out.astype(dx_ref.dtype)

    # ---- VMEM budget / cost hints ----
    weight_bytes = dsize * sum(int(np.prod(operands[k].shape)) for k in worder)
    act_bytes = dsize * (N_pad * D1p + Eb_pad * D1p + Ec_pad * C1p)
    scratch_bytes = dsize * ((N_pad + Eb_pad + Ec_pad) * (OUT1 + WMAX))
    if resident:
        oper_vmem = oper_res_bytes
    else:
        oper_vmem = 2 * dsize * TN * (N_pad + Eb_pad + Ec_pad)
    stream_vmem = 2 * dsize * TN * (LANE + OUT1 + OUT2) + 2 * 4 * TN * OUT2
    vmem_est = scratch_bytes + 2 * (weight_bytes + act_bytes) + oper_vmem + stream_vmem
    # TODO(synk): invariant full-spec inputs are still double-buffered by the pipeliner;
    # pipeline_mode=pl.Buffered(1) would halve that footprint where supported.
    vmem_limit = int(min(max(32 << 20, int(vmem_est * 1.5)), 48 << 20))

    flops = 2 * (N_pad * (N_pad + Eb_pad + Ec_pad) * (OUT1 + OUT2)
                 + N_pad * D1p * 5 * OUT1 + N_pad * H1p * 5 * OUT2
                 + Eb_pad * D1p * 2 * OUT1 + Ec_pad * C1p * 2 * OUT1
                 + (Eb_pad + Ec_pad) * H1p * OUT2)
    bytes_acc = ((1 if resident else 2) * oper_res_bytes + weight_bytes + act_bytes
                 + dsize * N_pad * (LANE + OUT1 + OUT2) + 4 * N_pad * OUT2)

    # TODO(synk): for very large graphs additionally tile the column (K) axis of A with an
    # accumulator, and on v7x split the two phases into two "parallel" pallas_calls so both
    # TensorCores are used (h_int round-tripped through HBM).
    call = pl.pallas_call(
        kernel,
        out_shape=jax.ShapeDtypeStruct((N_pad, OUT2), jnp.float32),
        grid_spec=pltpu.PrefetchScalarGridSpec(
            num_scalar_prefetch=0,
            grid=(2, N_pad // TN),
            in_specs=in_specs,
            out_specs=out_spec,
            scratch_shapes=[pltpu.VMEM((N_pad, OUT1), cdt),    # h_int
                            pltpu.VMEM((Eb_pad, OUT1), cdt),   # h_bound
                            pltpu.VMEM((Ec_pad, OUT1), cdt),   # h_u
                            pltpu.VMEM((N_pad, WMAX), cdt),    # hoisted x@Wa / h@Wa2
                            pltpu.VMEM((Eb_pad, WMAX), cdt),   # hoisted xb@Wb / hb@Wb2
                            pltpu.VMEM((Ec_pad, WMAX), cdt)]), # hoisted u@Wc  / hu@Wc2
        compiler_params=pltpu.CompilerParams(
            dimension_semantics=("arbitrary", "arbitrary"),
            vmem_limit_bytes=vmem_limit),
        cost_estimate=pl.CostEstimate(flops=int(flops), transcendentals=0,
                                      bytes_accessed=int(bytes_acc)),
    )

    graph_args = [jnp.asarray(operands[k], cdt) for k in gorder]
    weight_args = [jnp.asarray(operands[k], cdt) for k in worder]
    meta = dict(N=N, Eb=Eb, Ec=Ec, N_pad=N_pad, Eb_pad=Eb_pad, Ec_pad=Ec_pad,
                D1p=D1p, C1p=C1p, H1p=H1p, out_dim=input_dim, cdt=cdt,
                TN=TN, resident=resident)
    return dict(call=call, graph_args=graph_args, weight_args=weight_args, meta=meta)


def diffop_apply(prep, x_int, x_bound, u):
    m = prep['meta']
    cdt = m['cdt']
    x_int = jnp.asarray(x_int)
    if x_int.ndim == 3 and x_int.shape[0] == 1:      # mirrors torch .squeeze(0)
        x_int = x_int[0]
    x_bound = jnp.asarray(x_bound)
    u = jnp.asarray(u)
    assert x_int.shape[0] == m['N']
    # like the torch module, boundary/control features must line up row-for-row with
    # the (filtered) boundary/control edges
    assert x_bound.shape[0] == m['Eb'] and u.shape[0] == m['Ec']

    x_p = jnp.pad(x_int.astype(cdt),
                  ((0, m['N_pad'] - x_int.shape[0]), (0, m['D1p'] - x_int.shape[1])))
    xb_p = jnp.pad(x_bound.astype(cdt),
                   ((0, m['Eb_pad'] - x_bound.shape[0]), (0, m['D1p'] - x_bound.shape[1])))
    u_p = jnp.pad(u.astype(cdt),
                  ((0, m['Ec_pad'] - u.shape[0]), (0, m['C1p'] - u.shape[1])))
    out = prep['call'](*prep['graph_args'], x_p, xb_p, u_p, *prep['weight_args'])
    return out[:m['N'], :m['out_dim']]


# ------------------------------------------------------------------
# Parameter init (deterministic, torch.nn.Linear-style uniform fan-in)
# ------------------------------------------------------------------
_PARAM_ORDER = ['ii', 'bi', 'ci', 'bb', 'cc', 'im', 'is', 'bm', 'bs', 'cm', 'cs']


def _init_linear(key, din, dout):
    k1, k2 = jax.random.split(key)
    bound = 1.0 / np.sqrt(din)
    W = jax.random.uniform(k1, (din, dout), jnp.float32, -bound, bound)
    b = jax.random.uniform(k2, (1, dout), jnp.float32, -bound, bound)
    return W, b


def init_mp_params(key, input_dim, control_dim, message_dim, hidden_dim):
    dims = {
        'ii': (2 * input_dim, message_dim),
        'bi': (2 * input_dim, message_dim),
        'ci': (input_dim + control_dim, message_dim),
        'bb': (2 * input_dim, message_dim),
        'cc': (2 * control_dim, message_dim),
        'im': (message_dim, hidden_dim),
        'is': (input_dim, hidden_dim),
        'bm': (message_dim, hidden_dim),
        'bs': (input_dim, hidden_dim),
        'cm': (message_dim, hidden_dim),
        'cs': (control_dim, hidden_dim),
    }
    keys = jax.random.split(key, len(_PARAM_ORDER))
    p = {}
    for k, nm in zip(keys, _PARAM_ORDER):
        W, b = _init_linear(k, *dims[nm])
        p['W_' + nm] = W
        p['b_' + nm] = b
    return p


# ------------------------------------------------------------------
# DiffOp: interpolation (host-side scalar branching) + fused kernel
# ------------------------------------------------------------------
def interpolation(t, timestamps, X_bound, U):
    # TODO(synk): data-dependent scalar branching on t stays on the host (no clean
    # Pallas equivalent); cost is negligible.
    ts = np.asarray(timestamps, np.float32)
    if t > ts[-1]:
        return X_bound[-1], U[-1]
    if len(ts) == 1:
        k = 0
    else:
        idx = np.where((ts[:-1] <= t) & (t <= ts[1:]))[0]
        k = int(idx[-1])
    if k == len(ts) - 1:
        return X_bound[k], U[k]
    min_t, max_t = float(ts[k]), float(ts[k + 1])
    s = (t - min_t) / (max_t - min_t)
    Xb_t = (1.0 - s) * X_bound[k] + s * X_bound[k + 1]
    if k == len(U) - 1:
        U_t = (1.0 - s) * U[k]
    else:
        U_t = (1.0 - s) * U[k] + s * U[k + 1]
    return Xb_t, U_t


def diffop_forward(t, state, prep):
    x_int_t, X_bound, U, ei_int, ei_bound, ei_ctrl, timestamps = state
    x_bound_t, u_t = interpolation(t, timestamps, X_bound, U)
    dx_int = diffop_apply(prep, x_int_t, x_bound_t, u_t)
    return (dx_int,
            jnp.zeros_like(jnp.asarray(X_bound)),
            jnp.zeros_like(jnp.asarray(U)),
            jnp.zeros_like(jnp.asarray(ei_int)),
            jnp.zeros_like(jnp.asarray(ei_bound)),
            jnp.zeros_like(jnp.asarray(ei_ctrl)),
            jnp.zeros_like(jnp.asarray(timestamps)))


# ------------------------------------------------------------------
# NumPy reference of the torch forward (for runtime verification)
# ------------------------------------------------------------------
def _reference_layer(x_int, x_bound, u, ei_int, ei_bound, ei_ctrl, p, bidx, cidx):
    x_int = np.asarray(x_int, np.float64)
    x_bound = np.asarray(x_bound, np.float64)
    u = np.asarray(u, np.float64)
    P = {k: np.asarray(v, np.float64) for k, v in p.items()}
    ei_bound = ei_bound[:, np.isin(ei_bound[0], bidx)]
    ei_ctrl = ei_ctrl[:, np.isin(ei_ctrl[0], cidx)]
    src, tgt = ei_int[0], ei_int[1]
    m_ii = np.concatenate([x_int[src], x_int[tgt]], 1) @ P['W_ii'] + P['b_ii']
    m_bi = np.concatenate([x_bound, x_int[ei_bound[1]]], 1) @ P['W_bi'] + P['b_bi']
    m_ci = np.concatenate([u, x_int[ei_ctrl[1]]], 1) @ P['W_ci'] + P['b_ci']
    all_tgt = np.concatenate([tgt, ei_bound[1], ei_ctrl[1]])
    all_msg = np.concatenate([m_ii, m_bi, m_ci], 0)
    N = x_int.shape[0]
    acc = np.zeros((N, all_msg.shape[1]))
    np.add.at(acc, all_tgt, all_msg)
    cnt = np.bincount(all_tgt, minlength=N).astype(np.float64)
    agg = acc / np.maximum(cnt, 1.0)[:, None]
    int_up = x_int @ P['W_is'] + P['b_is'] + agg @ P['W_im'] + P['b_im']
    m_bb = np.concatenate([x_bound, x_bound], 1) @ P['W_bb'] + P['b_bb']
    bnd_up = x_bound @ P['W_bs'] + P['b_bs'] + m_bb @ P['W_bm'] + P['b_bm']
    m_cc = np.concatenate([u, u], 1) @ P['W_cc'] + P['b_cc']
    ctl_up = u @ P['W_cs'] + P['b_cs'] + m_cc @ P['W_cm'] + P['b_cm']
    return int_up, bnd_up, ctl_up


# ------------------------------------------------------------------
if __name__ == "__main__":
    key = jax.random.PRNGKey(0)

    # small synthetic sizes
    N_int, D_in, D_ctrl, D_msg, D_hid = 8, 8, 4, 16, 32
    E_int, E_bound, E_ctrl, T = 16, 4, 2, 4

    boundary_node_index = np.array([100, 101, 102, 103])
    control_node_index = np.array([200, 201])

    ei_int = np.stack([np.arange(E_int) % N_int,
                       (np.arange(E_int) // 2) % N_int]).astype(np.int32)
    ei_bound = np.stack([boundary_node_index, np.array([0, 2, 4, 6])]).astype(np.int32)
    ei_ctrl = np.stack([control_node_index, np.array([1, 5])]).astype(np.int32)

    k1, k2, k3, k4, k5 = jax.random.split(key, 5)
    x_int_t = jax.random.normal(k1, (1, N_int, D_in), jnp.float32)
    X_bound = jax.random.normal(k2, (T, E_bound, D_in), jnp.float32)
    U = jax.random.normal(k3, (T, E_ctrl, D_ctrl), jnp.float32)
    timestamps = jnp.arange(T, dtype=jnp.float32)

    # parameters: mp1(D_in, D_ctrl, D_msg, D_hid), mp2(D_hid, D_hid, D_msg, D_in)
    params1 = init_mp_params(k4, D_in, D_ctrl, D_msg, D_hid)
    params2 = init_mp_params(k5, D_hid, D_hid, D_msg, D_in)

    # one-time graph + parameter static preprocessing (hoisted out of the ODE RHS)
    graph = preprocess_graph(ei_int, ei_bound, ei_ctrl,
                             boundary_node_index, control_node_index, N_int)
    # f32 path (bit-faithful to the torch module; A/B/C resident in VMEM)
    prep_f32 = prepare_diffop(graph, params1, params2, D_in, D_ctrl, D_msg, D_hid,
                              compute_dtype=jnp.float32)
    # bf16 path (bandwidth-optimized storage, f32 accumulation; exercises the blocked
    # operator-streaming code path as well)
    prep_bf16 = prepare_diffop(graph, params1, params2, D_in, D_ctrl, D_msg, D_hid,
                               compute_dtype=jnp.bfloat16, operators_resident=False)

    state = (x_int_t, X_bound, U, ei_int, ei_bound, ei_ctrl, timestamps)
    t = 1.3

    dstate_dt = diffop_forward(t, state, prep_f32)
    dx_f32 = jax.block_until_ready(dstate_dt[0])
    x_bound_t, u_t = interpolation(t, timestamps, X_bound, U)
    dx_bf16 = jax.block_until_ready(diffop_apply(prep_bf16, x_int_t, x_bound_t, u_t))

    assert dx_f32.shape == (N_int, D_in)
    assert np.all(np.isfinite(np.asarray(dx_f32)))
    assert np.all(np.isfinite(np.asarray(dx_bf16)))

    # verify against a straightforward NumPy reference of the torch forward pass
    h_i, h_b, h_u = _reference_layer(np.asarray(x_int_t)[0], np.asarray(x_bound_t),
                                     np.asarray(u_t), ei_int, ei_bound, ei_ctrl,
                                     params1, boundary_node_index, control_node_index)
    ref_dx, _, _ = _reference_layer(h_i, h_b, h_u, ei_int, ei_bound, ei_ctrl,
                                    params2, boundary_node_index, control_node_index)
    np.testing.assert_allclose(np.asarray(dx_f32), ref_dx, rtol=2e-4, atol=2e-4)
    np.testing.assert_allclose(np.asarray(dx_bf16), ref_dx, rtol=6e-2, atol=6e-2)

    print("KERNEL_OK")
</pallas_src>

<mosaic_0001>
module attributes {stable_mosaic.version = 11 : i64} {
  func.func @kernel(%arg0: i32, %arg1: i32, %arg2: memref<8x8xf32, #tpu.memory_space<vmem>>, %arg3: memref<8x8xf32, #tpu.memory_space<vmem>>, %arg4: memref<8x8xf32, #tpu.memory_space<vmem>>, %arg5: memref<8x128xf32, #tpu.memory_space<vmem>>, %arg6: memref<8x128xf32, #tpu.memory_space<vmem>>, %arg7: memref<8x128xf32, #tpu.memory_space<vmem>>, %arg8: memref<8x128xf32, #tpu.memory_space<vmem>>, %arg9: memref<8x128xf32, #tpu.memory_space<vmem>>, %arg10: memref<8x128xf32, #tpu.memory_space<vmem>>, %arg11: memref<128x128xf32, #tpu.memory_space<vmem>>, %arg12: memref<128x128xf32, #tpu.memory_space<vmem>>, %arg13: memref<128x128xf32, #tpu.memory_space<vmem>>, %arg14: memref<128x512xf32, #tpu.memory_space<vmem>>, %arg15: memref<128x128xf32, #tpu.memory_space<vmem>>, %arg16: memref<128x128xf32, #tpu.memory_space<vmem>>, %arg17: memref<2x128xf32, #tpu.memory_space<vmem>>, %arg18: memref<128x128xf32, #tpu.memory_space<vmem>>, %arg19: memref<128x128xf32, #tpu.memory_space<vmem>>, %arg20: memref<128x128xf32, #tpu.memory_space<vmem>>, %arg21: memref<128x512xf32, #tpu.memory_space<vmem>>, %arg22: memref<8x128xf32, #tpu.memory_space<vmem>>, %arg23: memref<8x128xf32, #tpu.memory_space<vmem>>, %arg24: memref<8x128xf32, #tpu.memory_space<vmem>>, %arg25: memref<8x128xf32, #tpu.memory_space<vmem>>, %arg26: memref<8x128xf32, #tpu.memory_space<vmem>>, %arg27: memref<8x128xf32, #tpu.memory_space<vmem>>, %arg28: memref<8x128xf32, #tpu.memory_space<vmem>>) attributes {dimension_semantics = [#tpu.dimension_semantics<arbitrary>, #tpu.dimension_semantics<arbitrary>], iteration_bounds = array<i64: 2, 1>, scalar_prefetch = 0 : i64, scratch_operands = 6 : i64, tpu.core_type = #tpu.core_type<tc>, window_params = [{pipeline_mode = #tpu.pipeline_mode<synchronous>, transform_indices = @transform_0, window_bounds = array<i64: 8, 8>}, {pipeline_mode = #tpu.pipeline_mode<synchronous>, transform_indices = @transform_1, window_bounds = array<i64: 8, 8>}, {pipeline_mode = #tpu.pipeline_mode<synchronous>, transform_indices = @transform_2, window_bounds = array<i64: 8, 8>}, {transform_indices = @transform_3, window_bounds = array<i64: 8, 128>}, {transform_indices = @transform_4, window_bounds = array<i64: 8, 128>}, {transform_indices = @transform_5, window_bounds = array<i64: 8, 128>}, {pipeline_mode = #tpu.pipeline_mode<synchronous>, transform_indices = @transform_6, window_bounds = array<i64: 8, 128>}, {pipeline_mode = #tpu.pipeline_mode<synchronous>, transform_indices = @transform_7, window_bounds = array<i64: 8, 128>}, {pipeline_mode = #tpu.pipeline_mode<synchronous>, transform_indices = @transform_8, window_bounds = array<i64: 8, 128>}, {pipeline_mode = #tpu.pipeline_mode<synchronous>, transform_indices = @transform_9, window_bounds = array<i64: 128, 128>}, {pipeline_mode = #tpu.pipeline_mode<synchronous>, transform_indices = @transform_10, window_bounds = array<i64: 128, 128>}, {pipeline_mode = #tpu.pipeline_mode<synchronous>, transform_indices = @transform_11, window_bounds = array<i64: 128, 128>}, {pipeline_mode = #tpu.pipeline_mode<synchronous>, transform_indices = @transform_12, window_bounds = array<i64: 128, 512>}, {pipeline_mode = #tpu.pipeline_mode<synchronous>, transform_indices = @transform_13, window_bounds = array<i64: 128, 128>}, {pipeline_mode = #tpu.pipeline_mode<synchronous>, transform_indices = @transform_14, window_bounds = array<i64: 128, 128>}, {pipeline_mode = #tpu.pipeline_mode<synchronous>, transform_indices = @transform_15, window_bounds = array<i64: 2, 128>}, {pipeline_mode = #tpu.pipeline_mode<synchronous>, transform_indices = @transform_16, window_bounds = array<i64: 128, 128>}, {pipeline_mode = #tpu.pipeline_mode<synchronous>, transform_indices = @transform_17, window_bounds = array<i64: 128, 128>}, {pipeline_mode = #tpu.pipeline_mode<synchronous>, transform_indices = @transform_18, window_bounds = array<i64: 128, 128>}, {pipeline_mode = #tpu.pipeline_mode<synchronous>, transform_indices = @transform_19, window_bounds = array<i64: 128, 512>}, {transform_indices = @transform_20, window_bounds = array<i64: 8, 128>}]} {
    %c8_i32 = arith.constant 8 : i32
    %0 = arith.muli %arg1, %c8_i32 : i32
    %1 = tpu.assume_multiple %0, 8 : i32
    %c0_i32 = arith.constant 0 : i32
    %2 = arith.cmpi eq, %arg0, %c0_i32 : i32
    %3 = arith.extui %2 : i1 to i32
    %c0_i32_0 = arith.constant 0 : i32
    %4 = arith.cmpi ne, %3, %c0_i32_0 : i32
    scf.if %4 {
      %c0_i32_2 = arith.constant 0 : i32
      %8 = arith.cmpi eq, %arg1, %c0_i32_2 : i32
      %9 = arith.extui %8 : i1 to i32
      %c0_i32_3 = arith.constant 0 : i32
      %10 = arith.cmpi ne, %9, %c0_i32_3 : i32
      scf.if %10 {
        %c0_25 = arith.constant 0 : index
        %c0_26 = arith.constant 0 : index
        %50 = vector.load %arg8[%c0_25, %c0_26] : memref<8x128xf32, #tpu.memory_space<vmem>>, vector<8x128xf32>
        %c0_27 = arith.constant 0 : index
        %c0_28 = arith.constant 0 : index
        %51 = vector.load %arg11[%c0_27, %c0_28] : memref<128x128xf32, #tpu.memory_space<vmem>>, vector<128x128xf32>
        %cst_29 = arith.constant dense<0.000000e+00> : vector<8x128xf32>
        %52 = tpu.matmul %50, %51, %cst_29 {dimension_numbers = #tpu.dot_dimension_numbers<[1], [0], [0], [1], [0, 0, 1, 1], [], []>} : vector<8x128xf32>, vector<128x128xf32>, vector<8x128xf32> -> vector<8x128xf32>
        %c0_30 = arith.constant 0 : index
        %c0_31 = arith.constant 0 : index
        %53 = vector.load %arg26[%c0_30, %c0_31] : memref<8x128xf32, #tpu.memory_space<vmem>>, vector<8x128xf32>
        tpu.vector_store %arg26[%c0_30, %c0_31], %52 {strides = array<i32>} : memref<8x128xf32, #tpu.memory_space<vmem>>, vector<8x128xf32>,
        %c0_32 = arith.constant 0 : index
        %c0_33 = arith.constant 0 : index
        %54 = vector.load %arg9[%c0_32, %c0_33] : memref<8x128xf32, #tpu.memory_space<vmem>>, vector<8x128xf32>
        %c0_34 = arith.constant 0 : index
        %c0_35 = arith.constant 0 : index
        %55 = vector.load %arg12[%c0_34, %c0_35] : memref<128x128xf32, #tpu.memory_space<vmem>>, vector<128x128xf32>
        %cst_36 = arith.constant dense<0.000000e+00> : vector<8x128xf32>
        %56 = tpu.matmul %54, %55, %cst_36 {dimension_numbers = #tpu.dot_dimension_numbers<[1], [0], [0], [1], [0, 0, 1, 1], [], []>} : vector<8x128xf32>, vector<128x128xf32>, vector<8x128xf32> -> vector<8x128xf32>
        %c0_37 = arith.constant 0 : index
        %c0_38 = arith.constant 0 : index
        %57 = vector.load %arg27[%c0_37, %c0_38] : memref<8x128xf32, #tpu.memory_space<vmem>>, vector<8x128xf32>
        tpu.vector_store %arg27[%c0_37, %c0_38], %56 {strides = array<i32>} : memref<8x128xf32, #tpu.memory_space<vmem>>, vector<8x128xf32>,
        %c0_39 = arith.constant 0 : index
        %c0_40 = arith.constant 0 : index
        %58 = vector.load %arg10[%c0_39, %c0_40] : memref<8x128xf32, #tpu.memory_space<vmem>>, vector<8x128xf32>
        %c0_41 = arith.constant 0 : index
        %c0_42 = arith.constant 0 : index
        %59 = vector.load %arg13[%c0_41, %c0_42] : memref<128x128xf32, #tpu.memory_space<vmem>>, vector<128x128xf32>
        %cst_43 = arith.constant dense<0.000000e+00> : vector<8x128xf32>
        %60 = tpu.matmul %58, %59, %cst_43 {dimension_numbers = #tpu.dot_dimension_numbers<[1], [0], [0], [1], [0, 0, 1, 1], [], []>} : vector<8x128xf32>, vector<128x128xf32>, vector<8x128xf32> -> vector<8x128xf32>
        %c0_44 = arith.constant 0 : index
        %c0_45 = arith.constant 0 : index
        %61 = vector.load %arg28[%c0_44, %c0_45] : memref<8x128xf32, #tpu.memory_space<vmem>>, vector<8x128xf32>
        tpu.vector_store %arg28[%c0_44, %c0_45], %60 {strides = array<i32>} : memref<8x128xf32, #tpu.memory_space<vmem>>, vector<8x128xf32>,
        %c0_46 = arith.constant 0 : index
        %c0_47 = arith.constant 0 : index
        %62 = vector.load %arg9[%c0_46, %c0_47] : memref<8x128xf32, #tpu.memory_space<vmem>>, vector<8x128xf32>
        %c0_48 = arith.constant 0 : index
        %c0_49 = arith.constant 0 : index
        %63 = vector.load %arg15[%c0_48, %c0_49] : memref<128x128xf32, #tpu.memory_space<vmem>>, vector<128x128xf32>
        %cst_50 = arith.constant dense<0.000000e+00> : vector<8x128xf32>
        %64 = tpu.matmul %62, %63, %cst_50 {dimension_numbers = #tpu.dot_dimension_numbers<[1], [0], [0], [1], [0, 0, 1, 1], [], []>} : vector<8x128xf32>, vector<128x128xf32>, vector<8x128xf32> -> vector<8x128xf32>
        %c0_51 = arith.constant 0 : index
        %c0_52 = arith.constant 0 : index
        %65 = vector.load %arg17[%c0_51, %c0_52] : memref<2x128xf32, #tpu.memory_space<vmem>>, vector<1x128xf32>
        %66 = vector.broadcast %65 : vector<1x128xf32> to vector<8x128xf32>
        %67 = arith.addf %64, %66 : vector<8x128xf32>
        %c0_53 = arith.constant 0 : index
        %c0_54 = arith.constant 0 : index
        %68 = vector.load %arg24[%c0_53, %c0_54] : memref<8x128xf32, #tpu.memory_space<vmem>>, vector<8x128xf32>
        tpu.vector_store %arg24[%c0_53, %c0_54], %67 {strides = array<i32>} : memref<8x128xf32, #tpu.memory_space<vmem>>, vector<8x128xf32>,
        %c0_55 = arith.constant 0 : index
        %c0_56 = arith.constant 0 : index
        %69 = vector.load %arg10[%c0_55, %c0_56] : memref<8x128xf32, #tpu.memory_space<vmem>>, vector<8x128xf32>
        %c0_57 = arith.constant 0 : index
        %c0_58 = arith.constant 0 : index
        %70 = vector.load %arg16[%c0_57, %c0_58] : memref<128x128xf32, #tpu.memory_space<vmem>>, vector<128x128xf32>
        %cst_59 = arith.constant dense<0.000000e+00> : vector<8x128xf32>
        %71 = tpu.matmul %69, %70, %cst_59 {dimension_numbers = #tpu.dot_dimension_numbers<[1], [0], [0], [1], [0, 0, 1, 1], [], []>} : vector<8x128xf32>, vector<128x128xf32>, vector<8x128xf32> -> vector<8x128xf32>
        %c1_60 = arith.constant 1 : index
        %c0_61 = arith.constant 0 : index
        %72 = vector.load %arg17[%c1_60, %c0_61] : memref<2x128xf32, #tpu.memory_space<vmem>>, vector<1x128xf32>
        %73 = vector.broadcast %72 : vector<1x128xf32> to vector<8x128xf32>
        %74 = arith.addf %71, %73 : vector<8x128xf32>
        %c0_62 = arith.constant 0 : index
        %c0_63 = arith.constant 0 : index
        %75 = vector.load %arg25[%c0_62, %c0_63] : memref<8x128xf32, #tpu.memory_space<vmem>>, vector<8x128xf32>
        tpu.vector_store %arg25[%c0_62, %c0_63], %74 {strides = array<i32>} : memref<8x128xf32, #tpu.memory_space<vmem>>, vector<8x128xf32>,
      } else {
      }
      %11 = arith.index_cast %1 : i32 to index
      %c0 = arith.constant 0 : index
      %12 = vector.load %arg2[%11, %c0] : memref<8x8xf32, #tpu.memory_space<vmem>>, vector<8x8xf32>
      %13 = arith.index_cast %1 : i32 to index
      %c0_4 = arith.constant 0 : index
      %14 = vector.load %arg3[%13, %c0_4] : memref<8x8xf32, #tpu.memory_space<vmem>>, vector<8x8xf32>
      %15 = arith.index_cast %1 : i32 to index
      %c0_5 = arith.constant 0 : index
      %16 = vector.load %arg4[%15, %c0_5] : memref<8x8xf32, #tpu.memory_space<vmem>>, vector<8x8xf32>
      %17 = arith.index_cast %1 : i32 to index
      %c0_6 = arith.constant 0 : index
      %18 = vector.load %arg8[%17, %c0_6] : memref<8x128xf32, #tpu.memory_space<vmem>>, vector<8x128xf32>
      %c0_7 = arith.constant 0 : index
      %c0_8 = arith.constant 0 : index
      %19 = vector.load %arg14[%c0_7, %c0_8] : memref<128x512xf32, #tpu.memory_space<vmem>>, vector<128x512xf32>
      %cst = arith.constant dense<0.000000e+00> : vector<8x512xf32>
      %20 = tpu.matmul %18, %19, %cst {dimension_numbers = #tpu.dot_dimension_numbers<[1], [0], [0], [1], [0, 0, 1, 1], [], []>} : vector<8x128xf32>, vector<128x512xf32>, vector<8x512xf32> -> vector<8x512xf32>
      %c0_9 = arith.constant 0 : index
      %c0_10 = arith.constant 0 : index
      %21 = vector.load %arg5[%c0_9, %c0_10] : memref<8x128xf32, #tpu.memory_space<vmem>>, vector<8x1xf32>
      %22 = vector.extract_strided_slice %20 {offsets = [0, 0], sizes = [8, 128], strides = [1, 1]} : vector<8x512xf32> to vector<8x128xf32>
      %23 = vector.broadcast %21 : vector<8x1xf32> to vector<8x128xf32>
      %24 = arith.mulf %23, %22 : vector<8x128xf32>
      %c0_11 = arith.constant 0 : index
      %c1 = arith.constant 1 : index
      %25 = vector.load %arg5[%c0_11, %c1] : memref<8x128xf32, #tpu.memory_space<vmem>>, vector<8x1xf32>
      %26 = vector.extract_strided_slice %20 {offsets = [0, 128], sizes = [8, 128], strides = [1, 1]} : vector<8x512xf32> to vector<8x128xf32>
      %27 = vector.broadcast %25 : vector<8x1xf32> to vector<8x128xf32>
      %28 = arith.mulf %27, %26 : vector<8x128xf32>
      %29 = arith.addf %24, %28 : vector<8x128xf32>
      %c0_12 = arith.constant 0 : index
      %c2 = arith.constant 2 : index
      %30 = vector.load %arg5[%c0_12, %c2] : memref<8x128xf32, #tpu.memory_space<vmem>>, vector<8x1xf32>
      %31 = vector.extract_strided_slice %20 {offsets = [0, 256], sizes = [8, 128], strides = [1, 1]} : vector<8x512xf32> to vector<8x128xf32>
      %32 = vector.broadcast %30 : vector<8x1xf32> to vector<8x128xf32>
      %33 = arith.mulf %32, %31 : vector<8x128xf32>
      %34 = arith.addf %29, %33 : vector<8x128xf32>
      %35 = vector.extract_strided_slice %20 {offsets = [0, 384], sizes = [8, 128], strides = [1, 1]} : vector<8x512xf32> to vector<8x128xf32>
      %36 = arith.addf %34, %35 : vector<8x128xf32>
      %c0_13 = arith.constant 0 : index
      %c0_14 = arith.constant 0 : index
      %37 = vector.load %arg26[%c0_13, %c0_14] : memref<8x128xf32, #tpu.memory_space<vmem>>, vector<8x128xf32>
      %cst_15 = arith.constant dense<0.000000e+00> : vector<8x128xf32>
      %38 = tpu.matmul %12, %37, %cst_15 {dimension_numbers = #tpu.dot_dimension_numbers<[1], [0], [0], [1], [0, 0, 1, 1], [], []>} : vector<8x8xf32>, vector<8x128xf32>, vector<8x128xf32> -> vector<8x128xf32>
      %39 = arith.addf %36, %38 : vector<8x128xf32>
      %c0_16 = arith.constant 0 : index
      %c0_17 = arith.constant 0 : index
      %40 = vector.load %arg27[%c0_16, %c0_17] : memref<8x128xf32, #tpu.memory_space<vmem>>, vector<8x128xf32>
      %cst_18 = arith.constant dense<0.000000e+00> : vector<8x128xf32>
      %41 = tpu.matmul %14, %40, %cst_18 {dimension_numbers = #tpu.dot_dimension_numbers<[1], [0], [0], [1], [0, 0, 1, 1], [], []>} : vector<8x8xf32>, vector<8x128xf32>, vector<8x128xf32> -> vector<8x128xf32>
      %42 = arith.addf %39, %41 : vector<8x128xf32>
      %c0_19 = arith.constant 0 : index
      %c0_20 = arith.constant 0 : index
      %43 = vector.load %arg28[%c0_19, %c0_20] : memref<8x128xf32, #tpu.memory_space<vmem>>, vector<8x128xf32>
      %cst_21 = arith.constant dense<0.000000e+00> : vector<8x128xf32>
      %44 = tpu.matmul %16, %43, %cst_21 {dimension_numbers = #tpu.dot_dimension_numbers<[1], [0], [0], [1], [0, 0, 1, 1], [], []>} : vector<8x8xf32>, vector<8x128xf32>, vector<8x128xf32> -> vector<8x128xf32>
      %45 = arith.addf %42, %44 : vector<8x128xf32>
      %c0_22 = arith.constant 0 : index
      %c0_23 = arith.constant 0 : index
      %46 = vector.load %arg6[%c0_22, %c0_23] : memref<8x128xf32, #tpu.memory_space<vmem>>, vector<8x128xf32>
      %47 = arith.addf %45, %46 : vector<8x128xf32>
      %48 = arith.index_cast %1 : i32 to index
      %c0_24 = arith.constant 0 : index
      %49 = vector.load %arg23[%48, %c0_24] : memref<8x128xf32, #tpu.memory_space<vmem>>, vector<8x128xf32>
      tpu.vector_store %arg23[%48, %c0_24], %47 {strides = array<i32>} : memref<8x128xf32, #tpu.memory_space<vmem>>, vector<8x128xf32>,
    } else {
    }
    %c1_i32 = arith.constant 1 : i32
    %5 = arith.cmpi eq, %arg0, %c1_i32 : i32
    %6 = arith.extui %5 : i1 to i32
    %c0_i32_1 = arith.constant 0 : i32
    %7 = arith.cmpi ne, %6, %c0_i32_1 : i32
    scf.if %7 {
      %c0_i32_2 = arith.constant 0 : i32
      %8 = arith.cmpi eq, %arg1, %c0_i32_2 : i32
      %9 = arith.extui %8 : i1 to i32
      %c0_i32_3 = arith.constant 0 : i32
      %10 = arith.cmpi ne, %9, %c0_i32_3 : i32
      scf.if %10 {
        %c0_26 = arith.constant 0 : index
        %c0_27 = arith.constant 0 : index
        %49 = vector.load %arg23[%c0_26, %c0_27] : memref<8x128xf32, #tpu.memory_space<vmem>>, vector<8x128xf32>
        %c0_28 = arith.constant 0 : index
        %c0_29 = arith.constant 0 : index
        %50 = vector.load %arg18[%c0_28, %c0_29] : memref<128x128xf32, #tpu.memory_space<vmem>>, vector<128x128xf32>
        %cst_30 = arith.constant dense<0.000000e+00> : vector<8x128xf32>
        %51 = tpu.matmul %49, %50, %cst_30 {dimension_numbers = #tpu.dot_dimension_numbers<[1], [0], [0], [1], [0, 0, 1, 1], [], []>} : vector<8x128xf32>, vector<128x128xf32>, vector<8x128xf32> -> vector<8x128xf32>
        %c0_31 = arith.constant 0 : index
        %c0_32 = arith.constant 0 : index
        %52 = vector.load %arg26[%c0_31, %c0_32] : memref<8x128xf32, #tpu.memory_space<vmem>>, vector<8x128xf32>
        tpu.vector_store %arg26[%c0_31, %c0_32], %51 {strides = array<i32>} : memref<8x128xf32, #tpu.memory_space<vmem>>, vector<8x128xf32>,
        %c0_33 = arith.constant 0 : index
        %c0_34 = arith.constant 0 : index
        %53 = vector.load %arg24[%c0_33, %c0_34] : memref<8x128xf32, #tpu.memory_space<vmem>>, vector<8x128xf32>
        %c0_35 = arith.constant 0 : index
        %c0_36 = arith.constant 0 : index
        %54 = vector.load %arg19[%c0_35, %c0_36] : memref<128x128xf32, #tpu.memory_space<vmem>>, vector<128x128xf32>
        %cst_37 = arith.constant dense<0.000000e+00> : vector<8x128xf32>
        %55 = tpu.matmul %53, %54, %cst_37 {dimension_numbers = #tpu.dot_dimension_numbers<[1], [0], [0], [1], [0, 0, 1, 1], [], []>} : vector<8x128xf32>, vector<128x128xf32>, vector<8x128xf32> -> vector<8x128xf32>
        %c0_38 = arith.constant 0 : index
        %c0_39 = arith.constant 0 : index
        %56 = vector.load %arg27[%c0_38, %c0_39] : memref<8x128xf32, #tpu.memory_space<vmem>>, vector<8x128xf32>
        tpu.vector_store %arg27[%c0_38, %c0_39], %55 {strides = array<i32>} : memref<8x128xf32, #tpu.memory_space<vmem>>, vector<8x128xf32>,
        %c0_40 = arith.constant 0 : index
        %c0_41 = arith.constant 0 : index
        %57 = vector.load %arg25[%c0_40, %c0_41] : memref<8x128xf32, #tpu.memory_space<vmem>>, vector<8x128xf32>
        %c0_42 = arith.constant 0 : index
        %c0_43 = arith.constant 0 : index
        %58 = vector.load %arg20[%c0_42, %c0_43] : memref<128x128xf32, #tpu.memory_space<vmem>>, vector<128x128xf32>
        %cst_44 = arith.constant dense<0.000000e+00> : vector<8x128xf32>
        %59 = tpu.matmul %57, %58, %cst_44 {dimension_numbers = #tpu.dot_dimension_numbers<[1], [0], [0], [1], [0, 0, 1, 1], [], []>} : vector<8x128xf32>, vector<128x128xf32>, vector<8x128xf32> -> vector<8x128xf32>
        %c0_45 = arith.constant 0 : index
        %c0_46 = arith.constant 0 : index
        %60 = vector.load %arg28[%c0_45, %c0_46] : memref<8x128xf32, #tpu.memory_space<vmem>>, vector<8x128xf32>
        tpu.vector_store %arg28[%c0_45, %c0_46], %59 {strides = array<i32>} : memref<8x128xf32, #tpu.memory_space<vmem>>, vector<8x128xf32>,
      } else {
      }
      %11 = arith.index_cast %1 : i32 to index
      %c0 = arith.constant 0 : index
      %12 = vector.load %arg2[%11, %c0] : memref<8x8xf32, #tpu.memory_space<vmem>>, vector<8x8xf32>
      %13 = arith.index_cast %1 : i32 to index
      %c0_4 = arith.constant 0 : index
      %14 = vector.load %arg3[%13, %c0_4] : memref<8x8xf32, #tpu.memory_space<vmem>>, vector<8x8xf32>
      %15 = arith.index_cast %1 : i32 to index
      %c0_5 = arith.constant 0 : index
      %16 = vector.load %arg4[%15, %c0_5] : memref<8x8xf32, #tpu.memory_space<vmem>>, vector<8x8xf32>
      %17 = arith.index_cast %1 : i32 to index
      %c0_6 = arith.constant 0 : index
      %18 = vector.load %arg23[%17, %c0_6] : memref<8x128xf32, #tpu.memory_space<vmem>>, vector<8x128xf32>
      %c0_7 = arith.constant 0 : index
      %c0_8 = arith.constant 0 : index
      %19 = vector.load %arg21[%c0_7, %c0_8] : memref<128x512xf32, #tpu.memory_space<vmem>>, vector<128x512xf32>
      %cst = arith.constant dense<0.000000e+00> : vector<8x512xf32>
      %20 = tpu.matmul %18, %19, %cst {dimension_numbers = #tpu.dot_dimension_numbers<[1], [0], [0], [1], [0, 0, 1, 1], [], []>} : vector<8x128xf32>, vector<128x512xf32>, vector<8x512xf32> -> vector<8x512xf32>
      %c0_9 = arith.constant 0 : index
      %c0_10 = arith.constant 0 : index
      %21 = vector.load %arg5[%c0_9, %c0_10] : memref<8x128xf32, #tpu.memory_space<vmem>>, vector<8x1xf32>
      %22 = vector.extract_strided_slice %20 {offsets = [0, 0], sizes = [8, 128], strides = [1, 1]} : vector<8x512xf32> to vector<8x128xf32>
      %23 = vector.broadcast %21 : vector<8x1xf32> to vector<8x128xf32>
      %24 = arith.mulf %23, %22 : vector<8x128xf32>
      %c0_11 = arith.constant 0 : index
      %c1 = arith.constant 1 : index
      %25 = vector.load %arg5[%c0_11, %c1] : memref<8x128xf32, #tpu.memory_space<vmem>>, vector<8x1xf32>
      %26 = vector.extract_strided_slice %20 {offsets = [0, 128], sizes = [8, 128], strides = [1, 1]} : vector<8x512xf32> to vector<8x128xf32>
      %27 = vector.broadcast %25 : vector<8x1xf32> to vector<8x128xf32>
      %28 = arith.mulf %27, %26 : vector<8x128xf32>
      %29 = arith.addf %24, %28 : vector<8x128xf32>
      %c0_12 = arith.constant 0 : index
      %c2 = arith.constant 2 : index
      %30 = vector.load %arg5[%c0_12, %c2] : memref<8x128xf32, #tpu.memory_space<vmem>>, vector<8x1xf32>
      %31 = vector.extract_strided_slice %20 {offsets = [0, 256], sizes = [8, 128], strides = [1, 1]} : vector<8x512xf32> to vector<8x128xf32>
      %32 = vector.broadcast %30 : vector<8x1xf32> to vector<8x128xf32>
      %33 = arith.mulf %32, %31 : vector<8x128xf32>
      %34 = arith.addf %29, %33 : vector<8x128xf32>
      %35 = vector.extract_strided_slice %20 {offsets = [0, 384], sizes = [8, 128], strides = [1, 1]} : vector<8x512xf32> to vector<8x128xf32>
      %36 = arith.addf %34, %35 : vector<8x128xf32>
      %c0_13 = arith.constant 0 : index
      %c0_14 = arith.constant 0 : index
      %37 = vector.load %arg26[%c0_13, %c0_14] : memref<8x128xf32, #tpu.memory_space<vmem>>, vector<8x128xf32>
      %cst_15 = arith.constant dense<0.000000e+00> : vector<8x128xf32>
      %38 = tpu.matmul %12, %37, %cst_15 {dimension_numbers = #tpu.dot_dimension_numbers<[1], [0], [0], [1], [0, 0, 1, 1], [], []>} : vector<8x8xf32>, vector<8x128xf32>, vector<8x128xf32> -> vector<8x128xf32>
      %39 = arith.addf %36, %38 : vector<8x128xf32>
      %c0_16 = arith.constant 0 : index
      %c0_17 = arith.constant 0 : index
      %40 = vector.load %arg27[%c0_16, %c0_17] : memref<8x128xf32, #tpu.memory_space<vmem>>, vector<8x128xf32>
      %cst_18 = arith.constant dense<0.000000e+00> : vector<8x128xf32>
      %41 = tpu.matmul %14, %40, %cst_18 {dimension_numbers = #tpu.dot_dimension_numbers<[1], [0], [0], [1], [0, 0, 1, 1], [], []>} : vector<8x8xf32>, vector<8x128xf32>, vector<8x128xf32> -> vector<8x128xf32>
      %42 = arith.addf %39, %41 : vector<8x128xf32>
      %c0_19 = arith.constant 0 : index
      %c0_20 = arith.constant 0 : index
      %43 = vector.load %arg28[%c0_19, %c0_20] : memref<8x128xf32, #tpu.memory_space<vmem>>, vector<8x128xf32>
      %cst_21 = arith.constant dense<0.000000e+00> : vector<8x128xf32>
      %44 = tpu.matmul %16, %43, %cst_21 {dimension_numbers = #tpu.dot_dimension_numbers<[1], [0], [0], [1], [0, 0, 1, 1], [], []>} : vector<8x8xf32>, vector<8x128xf32>, vector<8x128xf32> -> vector<8x128xf32>
      %45 = arith.addf %42, %44 : vector<8x128xf32>
      %c0_22 = arith.constant 0 : index
      %c0_23 = arith.constant 0 : index
      %46 = vector.load %arg7[%c0_22, %c0_23] : memref<8x128xf32, #tpu.memory_space<vmem>>, vector<8x128xf32>
      %47 = arith.addf %45, %46 : vector<8x128xf32>
      %c0_24 = arith.constant 0 : index
      %c0_25 = arith.constant 0 : index
      %48 = vector.load %arg22[%c0_24, %c0_25] : memref<8x128xf32, #tpu.memory_space<vmem>>, vector<8x128xf32>
      tpu.vector_store %arg22[%c0_24, %c0_25], %47 {strides = array<i32>} : memref<8x128xf32, #tpu.memory_space<vmem>>, vector<8x128xf32>,
    } else {
    }
    return
  }
  func.func @transform_0(%arg0: i32, %arg1: i32) -> (i32, i32) {
    %c0_i32 = arith.constant 0 : i32
    %c0_i32_0 = arith.constant 0 : i32
    %c0_i32_1 = arith.constant 0 : i32
    return %c0_i32, %c0_i32_0 : i32, i32
  }
  func.func @transform_1(%arg0: i32, %arg1: i32) -> (i32, i32) {
    %c0_i32 = arith.constant 0 : i32
    %c0_i32_0 = arith.constant 0 : i32
    %c0_i32_1 = arith.constant 0 : i32
    return %c0_i32, %c0_i32_0 : i32, i32
  }
  func.func @transform_2(%arg0: i32, %arg1: i32) -> (i32, i32) {
    %c0_i32 = arith.constant 0 : i32
    %c0_i32_0 = arith.constant 0 : i32
    %c0_i32_1 = arith.constant 0 : i32
    return %c0_i32, %c0_i32_0 : i32, i32
  }
  func.func @transform_3(%arg0: i32, %arg1: i32) -> (i32, i32) {
    %c0_i32 = arith.constant 0 : i32
    %c0_i32_0 = arith.constant 0 : i32
    return %arg1, %c0_i32 : i32, i32
  }
  func.func @transform_4(%arg0: i32, %arg1: i32) -> (i32, i32) {
    %c1_i32 = arith.constant 1 : i32
    %0 = arith.subi %c1_i32, %arg0 : i32
    %1 = arith.muli %arg1, %0 : i32
    %c0_i32 = arith.constant 0 : i32
    %c0_i32_0 = arith.constant 0 : i32
    return %1, %c0_i32 : i32, i32
  }
  func.func @transform_5(%arg0: i32, %arg1: i32) -> (i32, i32) {
    %0 = arith.muli %arg1, %arg0 : i32
    %c0_i32 = arith.constant 0 : i32
    %c0_i32_0 = arith.constant 0 : i32
    return %0, %c0_i32 : i32, i32
  }
  func.func @transform_6(%arg0: i32, %arg1: i32) -> (i32, i32) {
    %c0_i32 = arith.constant 0 : i32
    %c0_i32_0 = arith.constant 0 : i32
    %c0_i32_1 = arith.constant 0 : i32
    return %c0_i32, %c0_i32_0 : i32, i32
  }
  func.func @transform_7(%arg0: i32, %arg1: i32) -> (i32, i32) {
    %c0_i32 = arith.constant 0 : i32
    %c0_i32_0 = arith.constant 0 : i32
    %c0_i32_1 = arith.constant 0 : i32
    return %c0_i32, %c0_i32_0 : i32, i32
  }
  func.func @transform_8(%arg0: i32, %arg1: i32) -> (i32, i32) {
    %c0_i32 = arith.constant 0 : i32
    %c0_i32_0 = arith.constant 0 : i32
    %c0_i32_1 = arith.constant 0 : i32
    return %c0_i32, %c0_i32_0 : i32, i32
  }
  func.func @transform_9(%arg0: i32, %arg1: i32) -> (i32, i32) {
    %c0_i32 = arith.constant 0 : i32
    %c0_i32_0 = arith.constant 0 : i32
    %c0_i32_1 = arith.constant 0 : i32
    return %c0_i32, %c0_i32_0 : i32, i32
  }
  func.func @transform_10(%arg0: i32, %arg1: i32) -> (i32, i32) {
    %c0_i32 = arith.constant 0 : i32
    %c0_i32_0 = arith.constant 0 : i32
    %c0_i32_1 = arith.constant 0 : i32
    return %c0_i32, %c0_i32_0 : i32, i32
  }
  func.func @transform_11(%arg0: i32, %arg1: i32) -> (i32, i32) {
    %c0_i32 = arith.constant 0 : i32
    %c0_i32_0 = arith.constant 0 : i32
    %c0_i32_1 = arith.constant 0 : i32
    return %c0_i32, %c0_i32_0 : i32, i32
  }
  func.func @transform_12(%arg0: i32, %arg1: i32) -> (i32, i32) {
    %c0_i32 = arith.constant 0 : i32
    %c0_i32_0 = arith.constant 0 : i32
    %c0_i32_1 = arith.constant 0 : i32
    return %c0_i32, %c0_i32_0 : i32, i32
  }
  func.func @transform_13(%arg0: i32, %arg1: i32) -> (i32, i32) {
    %c0_i32 = arith.constant 0 : i32
    %c0_i32_0 = arith.constant 0 : i32
    %c0_i32_1 = arith.constant 0 : i32
    return %c0_i32, %c0_i32_0 : i32, i32
  }
  func.func @transform_14(%arg0: i32, %arg1: i32) -> (i32, i32) {
    %c0_i32 = arith.constant 0 : i32
    %c0_i32_0 = arith.constant 0 : i32
    %c0_i32_1 = arith.constant 0 : i32
    return %c0_i32, %c0_i32_0 : i32, i32
  }
  func.func @transform_15(%arg0: i32, %arg1: i32) -> (i32, i32) {
    %c0_i32 = arith.constant 0 : i32
    %c0_i32_0 = arith.constant 0 : i32
    %c0_i32_1 = arith.constant 0 : i32
    return %c0_i32, %c0_i32_0 : i32, i32
  }
  func.func @transform_16(%arg0: i32, %arg1: i32) -> (i32, i32) {
    %c0_i32 = arith.constant 0 : i32
    %c0_i32_0 = arith.constant 0 : i32
    %c0_i32_1 = arith.constant 0 : i32
    return %c0_i32, %c0_i32_0 : i32, i32
  }
  func.func @transform_17(%arg0: i32, %arg1: i32) -> (i32, i32) {
    %c0_i32 = arith.constant 0 : i32
    %c0_i32_0 = arith.constant 0 : i32
    %c0_i32_1 = arith.constant 0 : i32
    return %c0_i32, %c0_i32_0 : i32, i32
  }
  func.func @transform_18(%arg0: i32, %arg1: i32) -> (i32, i32) {
    %c0_i32 = arith.constant 0 : i32
    %c0_i32_0 = arith.constant 0 : i32
    %c0_i32_1 = arith.constant 0 : i32
    return %c0_i32, %c0_i32_0 : i32, i32
  }
  func.func @transform_19(%arg0: i32, %arg1: i32) -> (i32, i32) {
    %c0_i32 = arith.constant 0 : i32
    %c0_i32_0 = arith.constant 0 : i32
    %c0_i32_1 = arith.constant 0 : i32
    return %c0_i32, %c0_i32_0 : i32, i32
  }
  func.func @transform_20(%arg0: i32, %arg1: i32) -> (i32, i32) {
    %0 = arith.muli %arg1, %arg0 : i32
    %c0_i32 = arith.constant 0 : i32
    %c0_i32_0 = arith.constant 0 : i32
    return %0, %c0_i32 : i32, i32
  }
}

</mosaic_0001>

<llo_original>
// kernel: tpu_custom_call.1
$region0: #{tpu_custom_call.1}
  #allocation0 [shape = 'u32[]', space=smem, size = 0x4, offset = 0x4, fixed_abs, tag = 'smem constant byte address 0x4 - core index']
  #allocation1 [shape = 'u32[72,128]{1,0:T(1,128)}', space=vmem, size = 0x9000, scoped, tag = 'internal scratch']
  #allocation2 [shape = 'f32[8,128]{1,0:T(8,128)}', space=vmem, size = 0x1000, scoped, tag = 'scratch operand']
  #allocation3 [shape = 'f32[8,128]{1,0:T(8,128)}', space=vmem, size = 0x1000, scoped, tag = 'scratch operand']
  #allocation4 [shape = 'f32[8,128]{1,0:T(8,128)}', space=vmem, size = 0x1000, scoped, tag = 'scratch operand']
  #allocation5 [shape = 'f32[8,128]{1,0:T(8,128)}', space=vmem, size = 0x1000, scoped, tag = 'scratch operand']
  #allocation6 [shape = 'f32[8,128]{1,0:T(8,128)}', space=vmem, size = 0x1000, scoped, tag = 'scratch operand']
  #allocation7 [shape = 'f32[8,128]{1,0:T(8,128)}', space=vmem, size = 0x1000, scoped, tag = 'scratch operand']
  %s0 = inlined_call_operand.hbm [shape: f32[8,8], index: 0, kind: input, shape index: {}]
  %s1 = inlined_call_operand.hbm [shape: f32[8,8], index: 1, kind: input, shape index: {}]
  %s2 = inlined_call_operand.hbm [shape: f32[8,8], index: 2, kind: input, shape index: {}]
  %s3 = inlined_call_operand.hbm [shape: f32[8,128], index: 3, kind: input, shape index: {}]
  %s4 = inlined_call_operand.hbm [shape: f32[8,128], index: 4, kind: input, shape index: {}]
  %s5 = inlined_call_operand.hbm [shape: f32[8,128], index: 5, kind: input, shape index: {}]
  %s6 = inlined_call_operand.hbm [shape: f32[8,128], index: 6, kind: input, shape index: {}]
  %s7 = inlined_call_operand.hbm [shape: f32[8,128], index: 7, kind: input, shape index: {}]
  %s8 = inlined_call_operand.hbm [shape: f32[8,128], index: 8, kind: input, shape index: {}]
  %s9 = inlined_call_operand.hbm [shape: f32[128,128], index: 9, kind: input, shape index: {}]
  %s10 = inlined_call_operand.hbm [shape: f32[128,128], index: 10, kind: input, shape index: {}]
  %s11 = inlined_call_operand.hbm [shape: f32[128,128], index: 11, kind: input, shape index: {}]
  %s12 = inlined_call_operand.hbm [shape: f32[128,512], index: 12, kind: input, shape index: {}]
  %s13 = inlined_call_operand.hbm [shape: f32[128,128], index: 13, kind: input, shape index: {}]
  %s14 = inlined_call_operand.hbm [shape: f32[128,128], index: 14, kind: input, shape index: {}]
  %s15 = inlined_call_operand.vmem [shape: f32[2,128], index: 15, kind: input, shape index: {}]
  %s16 = inlined_call_operand.hbm [shape: f32[128,128], index: 16, kind: input, shape index: {}]
  %s17 = inlined_call_operand.hbm [shape: f32[128,128], index: 17, kind: input, shape index: {}]
  %s18 = inlined_call_operand.hbm [shape: f32[128,128], index: 18, kind: input, shape index: {}]
  %s19 = inlined_call_operand.hbm [shape: f32[128,512], index: 19, kind: input, shape index: {}]
  %s20 = inlined_call_operand.hbm [shape: f32[8,128], index: 20, kind: output, shape index: {}]
  %s21 = sld [smem:[#allocation0]]
  $region205: #{tpu_custom_call.1} parent=0
    _
  %s23 = ssub.s32 1, %s21
  %s24 = scalar_select 0, %s23, %s21
  $region1: #{tpu_custom_call.1} parent=0
    #allocation8 [shape = 'u8[4096]{0}', space=vmem, size = 0x1000, scoped, tag = 'input window, operand 0, single buffered']
    #allocation9 [shape = 's32[2]{0}', space=sflag, size = 0x8, scoped, tag = 'scoped memory for tpu_custom_call.1']
    #allocation10 [shape = 's32[2]{0}', space=sflag, size = 0x8, scoped, tag = 'scoped memory for tpu_custom_call.1']
    #allocation11 [shape = 'u8[4096]{0}', space=vmem, size = 0x1000, scoped, tag = 'input window, operand 1, single buffered']
    #allocation12 [shape = 's32[1]{0}', space=sflag, size = 0x4, scoped, tag = 'scoped memory for tpu_custom_call.1']
    #allocation13 [shape = 'u8[4096]{0}', space=vmem, size = 0x1000, scoped, tag = 'input window, operand 2, single buffered']
    #allocation14 [shape = 'u8[4096]{0}', space=vmem, size = 0x1000, scoped, tag = 'input window, operand 3, single buffered']
    #allocation15 [shape = 's32[1]{0}', space=sflag, size = 0x4, scoped, tag = 'scoped memory for tpu_custom_call.1']
    #allocation16 [shape = 'u8[8192]{0}', space=vmem, size = 0x2000, scoped, tag = 'input window, operand 4']
    #allocation17 [shape = 'u8[8192]{0}', space=vmem, size = 0x2000, scoped, tag = 'input window, operand 5']
    #allocation18 [shape = 'u8[4096]{0}', space=vmem, size = 0x1000, scoped, tag = 'input window, operand 6, single buffered']
    #allocation19 [shape = 'u8[4096]{0}', space=vmem, size = 0x1000, scoped, tag = 'input window, operand 7, single buffered']
    #allocation20 [shape = 'u8[4096]{0}', space=vmem, size = 0x1000, scoped, tag = 'input window, operand 8, single buffered']
    #allocation21 [shape = 's32[1]{0}', space=sflag, size = 0x4, scoped, tag = 'scoped memory for tpu_custom_call.1']
    #allocation22 [shape = 'u8[65536]{0}', space=vmem, size = 0x10000, scoped, tag = 'input window, operand 9, single buffered']
    #allocation23 [shape = 'u8[65536]{0}', space=vmem, size = 0x10000, scoped, tag = 'input window, operand 10, single buffered']
    #allocation24 [shape = 's32[1]{0}', space=sflag, size = 0x4, scoped, tag = 'scoped memory for tpu_custom_call.1']
    #allocation25 [shape = 'u8[65536]{0}', space=vmem, size = 0x10000, scoped, tag = 'input window, operand 11, single buffered']
    #allocation26 [shape = 'u8[262144]{0}', space=vmem, size = 0x40000, scoped, tag = 'input window, operand 12, single buffered']
    #allocation27 [shape = 's32[1]{0}', space=sflag, size = 0x4, scoped, tag = 'scoped memory for tpu_custom_call.1']
    #allocation28 [shape = 'u8[65536]{0}', space=vmem, size = 0x10000, scoped, tag = 'input window, operand 13, single buffered']
    #allocation29 [shape = 'u8[65536]{0}', space=vmem, size = 0x10000, scoped, tag = 'input window, operand 14, single buffered']
    #allocation30 [shape = 's32[1]{0}', space=sflag, size = 0x4, scoped, tag = 'scoped memory for tpu_custom_call.1']
    #allocation31 [shape = 'u8[65536]{0}', space=vmem, size = 0x10000, scoped, tag = 'input window, operand 16, single buffered']
    #allocation32 [shape = 'u8[65536]{0}', space=vmem, size = 0x10000, scoped, tag = 'input window, operand 17, single buffered']
    #allocation33 [shape = 's32[1]{0}', space=sflag, size = 0x4, scoped, tag = 'scoped memory for tpu_custom_call.1']
    #allocation34 [shape = 'u8[65536]{0}', space=vmem, size = 0x10000, scoped, tag = 'input window, operand 18, single buffered']
    #allocation35 [shape = 'u8[262144]{0}', space=vmem, size = 0x40000, scoped, tag = 'input window, operand 19, single buffered']
    #allocation36 [shape = 's32[1]{0}', space=sflag, size = 0x4, scoped, tag = 'scoped memory for tpu_custom_call.1']
    #allocation37 [shape = 'u8[8192]{0}', space=vmem, size = 0x2000, scoped, tag = 'output window, operand 0']
    %25 = vsyncpa [#allocation9], 0
    %26 = vsyncpa [#allocation12], 0
    %27 = vsyncpa [#allocation15], 0
    %28 = vsyncpa [#allocation21], 0
    %29 = vsyncpa [#allocation24], 0
    %30 = vsyncpa [#allocation27], 0
    %31 = vsyncpa [#allocation30], 0
    %32 = vsyncpa [#allocation33], 0
    %33 = vsyncpa [#allocation36], 0
    %34 = vsyncpa [#allocation10], 0
    %s35 = scalar_lea.sflag [#allocation10], 1
    %36 = vsyncpa %s35, 0
    loop: start=0, step=1, limit=4
    $region2: #{tpu_custom_call.1} parent=1 // loop_pre_header
      _
    $region3: #{tpu_custom_call.1} parent=1 // loop_header
      %s38 = sphi 0, %s42
      %p39 = scmp.ge.s32.totalorder %s38, 4
      %s45 = sphi 0, %s57
      %s46 = sphi 0, %s53
      %s47 = sphi 0, %s45
      %s48 = sphi 0, %s46
      %s49 = sphi 0, %s47
      %s50 = sphi 0, %s48
      %s58 = sphi 0, %s58
      %s60 = sphi 0, %s58
      %s61 = sphi 0, %s60
      %s75 = sphi 0, %s61
      %s79 = sphi 0, %s79
      %s81 = sphi 0, %s79
      %s82 = sphi 0, %s81
      %s96 = sphi 0, %s82
      %s100 = sphi 0, %s100
      %s102 = sphi 0, %s100
      %s103 = sphi 0, %s102
      %s117 = sphi 0, %s103
      %s123 = sphi 0, %s125
      %s126 = sphi 0, %s123
      %s127 = sphi 0, %s126
      %s143 = sphi 0, %s127
      %s153 = sphi 0, %s155
      %s156 = sphi 0, %s153
      %s157 = sphi 0, %s156
      %s173 = sphi 0, %s157
      %s181 = sphi 0, %s183
      %s184 = sphi 0, %s181
      %s185 = sphi 0, %s184
      %s201 = sphi 0, %s185
      %s205 = sphi 0, %s205
      %s207 = sphi 0, %s205
      %s208 = sphi 0, %s207
      %s222 = sphi 0, %s208
      %s226 = sphi 0, %s226
      %s228 = sphi 0, %s226
      %s229 = sphi 0, %s228
      %s243 = sphi 0, %s229
      %s247 = sphi 0, %s247
      %s249 = sphi 0, %s247
      %s250 = sphi 0, %s249
      %s264 = sphi 0, %s250
      %s268 = sphi 0, %s268
      %s270 = sphi 0, %s268
      %s271 = sphi 0, %s270
      %s285 = sphi 0, %s271
      %s289 = sphi 0, %s289
      %s291 = sphi 0, %s289
      %s292 = sphi 0, %s291
      %s306 = sphi 0, %s292
      %s310 = sphi 0, %s310
      %s312 = sphi 0, %s310
      %s313 = sphi 0, %s312
      %s327 = sphi 0, %s313
      %s331 = sphi 0, %s331
      %s333 = sphi 0, %s331
      %s334 = sphi 0, %s333
      %s348 = sphi 0, %s334
      %s352 = sphi 0, %s352
      %s354 = sphi 0, %s352
      %s355 = sphi 0, %s354
      %s369 = sphi 0, %s355
      %s373 = sphi 0, %s373
      %s375 = sphi 0, %s373
      %s376 = sphi 0, %s375
      %s390 = sphi 0, %s376
      %s394 = sphi 0, %s394
      %s396 = sphi 0, %s394
      %s397 = sphi 0, %s396
      %s411 = sphi 0, %s397
      %s415 = sphi 0, %s415
      %s417 = sphi 0, %s415
      %s418 = sphi 0, %s417
      %s432 = sphi 0, %s418
      %s436 = sphi 0, %s436
      %s438 = sphi 0, %s436
      %s439 = sphi 0, %s438
      %s453 = sphi 0, %s439
      %s457 = sphi 0, %s457
      %s459 = sphi 0, %s457
      %s460 = sphi 0, %s459
      %s474 = sphi 0, %s460
      %s478 = sphi 0, %s478
      %s480 = sphi 0, %s478
      %s481 = sphi 0, %s480
      %s495 = sphi 0, %s481
      %s503 = sphi 0, %s505
      %s506 = sphi 0, %s503
      %s507 = sphi 0, %s506
      %s523 = sphi 0, %s507
    $region4: #{tpu_custom_call.1} parent=1 // loop_header_branch
      %41 = sbr.rel (%p39) target = $region8
    $region5: #{tpu_custom_call.1} parent=1 // loop_body
      %s43 = ssub.s32 %s38, 1
      %s44 = ssub.s32 %s38, 2
      %s51 = sadd.s32 1, %s46
      %p52 = scmp.ge.s32.totalorder %s51, 1
      %s53 = scalar_select %p52, 0, %s51
      %s54 = sadd.s32 1, %s45
      %s55 = scalar_select %p52, %s54, %s45
      %p56 = scmp.ge.s32.totalorder %s55, 2
      %s57 = scalar_select %p56, 0, %s55
      %s59 = sadd.s32 %s58, 1
      %p62 = scmp.eq.s32.totalorder %s38, 1
      %p63 = scmp.ne.s32.totalorder %s58, %s60
      %p64 = scmp.eq.s32.totalorder %s38, 0
      %p65 = por %p63, %p64
      %p66 = scmp.ne.s32.totalorder %s58, %s60
      %p67 = scmp.eq.s32.totalorder %s43, 1
      %p68 = por %p66, %p67
      %p69 = scmp.ne.s32.totalorder %s60, %s61
      %p70 = scmp.eq.s32.totalorder %s43, 0
      %p71 = por %p69, %p70
      %p72 = scmp.ne.s32.totalorder %s60, %s61
      %p73 = scmp.eq.s32.totalorder %s44, 1
      %p74 = por %p72, %p73
      %p76 = scmp.ne.s32.totalorder %s61, %s75
      %p77 = scmp.eq.s32.totalorder %s44, 0
      %p78 = por %p76, %p77
      %s80 = sadd.s32 %s79, 1
      %p83 = scmp.eq.s32.totalorder %s38, 1
      %p84 = scmp.ne.s32.totalorder %s79, %s81
      %p85 = scmp.eq.s32.totalorder %s38, 0
      %p86 = por %p84, %p85
      %p87 = scmp.ne.s32.totalorder %s79, %s81
      %p88 = scmp.eq.s32.totalorder %s43, 1
      %p89 = por %p87, %p88
      %p90 = scmp.ne.s32.totalorder %s81, %s82
      %p91 = scmp.eq.s32.totalorder %s43, 0
      %p92 = por %p90, %p91
      %p93 = scmp.ne.s32.totalorder %s81, %s82
      %p94 = scmp.eq.s32.totalorder %s44, 1
      %p95 = por %p93, %p94
      %p97 = scmp.ne.s32.totalorder %s82, %s96
      %p98 = scmp.eq.s32.totalorder %s44, 0
      %p99 = por %p97, %p98
      %s101 = sadd.s32 %s100, 1
      %p104 = scmp.eq.s32.totalorder %s38, 1
      %p105 = scmp.ne.s32.totalorder %s100, %s102
      %p106 = scmp.eq.s32.totalorder %s38, 0
      %p107 = por %p105, %p106
      %p108 = scmp.ne.s32.totalorder %s100, %s102
      %p109 = scmp.eq.s32.totalorder %s43, 1
      %p110 = por %p108, %p109
      %p111 = scmp.ne.s32.totalorder %s102, %s103
      %p112 = scmp.eq.s32.totalorder %s43, 0
      %p113 = por %p111, %p112
      %p114 = scmp.ne.s32.totalorder %s102, %s103
      %p115 = scmp.eq.s32.totalorder %s44, 1
      %p116 = por %p114, %p115
      %p118 = scmp.ne.s32.totalorder %s103, %s117
      %p119 = scmp.eq.s32.totalorder %s44, 0
      %p120 = por %p118, %p119
      %s121 = ssub.s32 %s46, %s53
      %p122 = scmp.eq.s32.totalorder %s121, 0
      %s124 = sadd.s32 %s123, 1
      %s125 = scalar_select %p122, %s123, %s124
      %p128 = pneg %p122
      %p129 = scmp.eq.s32.totalorder %s38, 1
      %p130 = por %p128, %p129
      %p131 = scmp.ne.s32.totalorder %s123, %s126
      %p132 = scmp.eq.s32.totalorder %s38, 0
      %p133 = por %p131, %p132
      %p134 = scmp.ne.s32.totalorder %s123, %s126
      %p135 = scmp.eq.s32.totalorder %s43, 1
      %p136 = por %p134, %p135
      %p137 = scmp.ne.s32.totalorder %s126, %s127
      %p138 = scmp.eq.s32.totalorder %s43, 0
      %p139 = por %p137, %p138
      %p140 = scmp.ne.s32.totalorder %s126, %s127
      %p141 = scmp.eq.s32.totalorder %s44, 1
      %p142 = por %p140, %p141
      %p144 = scmp.ne.s32.totalorder %s127, %s143
      %p145 = scmp.eq.s32.totalorder %s44, 0
      %p146 = por %p144, %p145
      %s147 = ssub.s32 1, %s45
      %s148 = smul.u32 %s46, %s147
      %s149 = ssub.s32 1, %s57
      %s150 = smul.u32 %s53, %s149
      %s151 = ssub.s32 %s148, %s150
      %p152 = scmp.eq.s32.totalorder %s151, 0
      %s154 = sadd.s32 %s153, 1
      %s155 = scalar_select %p152, %s153, %s154
      %p158 = pneg %p152
      %p159 = scmp.eq.s32.totalorder %s38, 1
      %p160 = por %p158, %p159
      %p161 = scmp.ne.s32.totalorder %s153, %s156
      %p162 = scmp.eq.s32.totalorder %s38, 0
      %p163 = por %p161, %p162
      %p164 = scmp.ne.s32.totalorder %s153, %s156
      %p165 = scmp.eq.s32.totalorder %s43, 1
      %p166 = por %p164, %p165
      %p167 = scmp.ne.s32.totalorder %s156, %s157
      %p168 = scmp.eq.s32.totalorder %s43, 0
      %p169 = por %p167, %p168
      %p170 = scmp.ne.s32.totalorder %s156, %s157
      %p171 = scmp.eq.s32.totalorder %s44, 1
      %p172 = por %p170, %p171
      %p174 = scmp.ne.s32.totalorder %s157, %s173
      %p175 = scmp.eq.s32.totalorder %s44, 0
      %p176 = por %p174, %p175
      %s177 = smul.u32 %s46, %s45
      %s178 = smul.u32 %s53, %s57
      %s179 = ssub.s32 %s177, %s178
      %p180 = scmp.eq.s32.totalorder %s179, 0
      %s182 = sadd.s32 %s181, 1
      %s183 = scalar_select %p180, %s181, %s182
      %p186 = pneg %p180
      %p187 = scmp.eq.s32.totalorder %s38, 1
      %p188 = por %p186, %p187
      %p189 = scmp.ne.s32.totalorder %s181, %s184
      %p190 = scmp.eq.s32.totalorder %s38, 0
      %p191 = por %p189, %p190
      %p192 = scmp.ne.s32.totalorder %s181, %s184
      %p193 = scmp.eq.s32.totalorder %s43, 1
      %p194 = por %p192, %p193
      %p195 = scmp.ne.s32.totalorder %s184, %s185
      %p196 = scmp.eq.s32.totalorder %s43, 0
      %p197 = por %p195, %p196
      %p198 = scmp.ne.s32.totalorder %s184, %s185
      %p199 = scmp.eq.s32.totalorder %s44, 1
      %p200 = por %p198, %p199
      %p202 = scmp.ne.s32.totalorder %s185, %s201
      %p203 = scmp.eq.s32.totalorder %s44, 0
      %p204 = por %p202, %p203
      %s206 = sadd.s32 %s205, 1
      %p209 = scmp.eq.s32.totalorder %s38, 1
      %p210 = scmp.ne.s32.totalorder %s205, %s207
      %p211 = scmp.eq.s32.totalorder %s38, 0
      %p212 = por %p210, %p211
      %p213 = scmp.ne.s32.totalorder %s205, %s207
      %p214 = scmp.eq.s32.totalorder %s43, 1
      %p215 = por %p213, %p214
      %p216 = scmp.ne.s32.totalorder %s207, %s208
      %p217 = scmp.eq.s32.totalorder %s43, 0
      %p218 = por %p216, %p217
      %p219 = scmp.ne.s32.totalorder %s207, %s208
      %p220 = scmp.eq.s32.totalorder %s44, 1
      %p221 = por %p219, %p220
      %p223 = scmp.ne.s32.totalorder %s208, %s222
      %p224 = scmp.eq.s32.totalorder %s44, 0
      %p225 = por %p223, %p224
      %s227 = sadd.s32 %s226, 1
      %p230 = scmp.eq.s32.totalorder %s38, 1
      %p231 = scmp.ne.s32.totalorder %s226, %s228
      %p232 = scmp.eq.s32.totalorder %s38, 0
      %p233 = por %p231, %p232
      %p234 = scmp.ne.s32.totalorder %s226, %s228
      %p235 = scmp.eq.s32.totalorder %s43, 1
      %p236 = por %p234, %p235
      %p237 = scmp.ne.s32.totalorder %s228, %s229
      %p238 = scmp.eq.s32.totalorder %s43, 0
      %p239 = por %p237, %p238
      %p240 = scmp.ne.s32.totalorder %s228, %s229
      %p241 = scmp.eq.s32.totalorder %s44, 1
      %p242 = por %p240, %p241
      %p244 = scmp.ne.s32.totalorder %s229, %s243
      %p245 = scmp.eq.s32.totalorder %s44, 0
      %p246 = por %p244, %p245
      %s248 = sadd.s32 %s247, 1
      %p251 = scmp.eq.s32.totalorder %s38, 1
      %p252 = scmp.ne.s32.totalorder %s247, %s249
      %p253 = scmp.eq.s32.totalorder %s38, 0
      %p254 = por %p252, %p253
      %p255 = scmp.ne.s32.totalorder %s247, %s249
      %p256 = scmp.eq.s32.totalorder %s43, 1
      %p257 = por %p255, %p256
      %p258 = scmp.ne.s32.totalorder %s249, %s250
      %p259 = scmp.eq.s32.totalorder %s43, 0
      %p260 = por %p258, %p259
      %p261 = scmp.ne.s32.totalorder %s249, %s250
      %p262 = scmp.eq.s32.totalorder %s44, 1
      %p263 = por %p261, %p262
      %p265 = scmp.ne.s32.totalorder %s250, %s264
      %p266 = scmp.eq.s32.totalorder %s44, 0
      %p267 = por %p265, %p266
      %s269 = sadd.s32 %s268, 1
      %p272 = scmp.eq.s32.totalorder %s38, 1
      %p273 = scmp.ne.s32.totalorder %s268, %s270
      %p274 = scmp.eq.s32.totalorder %s38, 0
      %p275 = por %p273, %p274
      %p276 = scmp.ne.s32.totalorder %s268, %s270
      %p277 = scmp.eq.s32.totalorder %s43, 1
      %p278 = por %p276, %p277
      %p279 = scmp.ne.s32.totalorder %s270, %s271
      %p280 = scmp.eq.s32.totalorder %s43, 0
      %p281 = por %p279, %p280
      %p282 = scmp.ne.s32.totalorder %s270, %s271
      %p283 = scmp.eq.s32.totalorder %s44, 1
      %p284 = por %p282, %p283
      %p286 = scmp.ne.s32.totalorder %s271, %s285
      %p287 = scmp.eq.s32.totalorder %s44, 0
      %p288 = por %p286, %p287
      %s290 = sadd.s32 %s289, 1
      %p293 = scmp.eq.s32.totalorder %s38, 1
      %p294 = scmp.ne.s32.totalorder %s289, %s291
      %p295 = scmp.eq.s32.totalorder %s38, 0
      %p296 = por %p294, %p295
      %p297 = scmp.ne.s32.totalorder %s289, %s291
      %p298 = scmp.eq.s32.totalorder %s43, 1
      %p299 = por %p297, %p298
      %p300 = scmp.ne.s32.totalorder %s291, %s292
      %p301 = scmp.eq.s32.totalorder %s43, 0
      %p302 = por %p300, %p301
      %p303 = scmp.ne.s32.totalorder %s291, %s292
      %p304 = scmp.eq.s32.totalorder %s44, 1
      %p305 = por %p303, %p304
      %p307 = scmp.ne.s32.totalorder %s292, %s306
      %p308 = scmp.eq.s32.totalorder %s44, 0
      %p309 = por %p307, %p308
      %s311 = sadd.s32 %s310, 1
      %p314 = scmp.eq.s32.totalorder %s38, 1
      %p315 = scmp.ne.s32.totalorder %s310, %s312
      %p316 = scmp.eq.s32.totalorder %s38, 0
      %p317 = por %p315, %p316
      %p318 = scmp.ne.s32.totalorder %s310, %s312
      %p319 = scmp.eq.s32.totalorder %s43, 1
      %p320 = por %p318, %p319
      %p321 = scmp.ne.s32.totalorder %s312, %s313
      %p322 = scmp.eq.s32.totalorder %s43, 0
      %p323 = por %p321, %p322
      %p324 = scmp.ne.s32.totalorder %s312, %s313
      %p325 = scmp.eq.s32.totalorder %s44, 1
      %p326 = por %p324, %p325
      %p328 = scmp.ne.s32.totalorder %s313, %s327
      %p329 = scmp.eq.s32.totalorder %s44, 0
      %p330 = por %p328, %p329
      %s332 = sadd.s32 %s331, 1
      %p335 = scmp.eq.s32.totalorder %s38, 1
      %p336 = scmp.ne.s32.totalorder %s331, %s333
      %p337 = scmp.eq.s32.totalorder %s38, 0
      %p338 = por %p336, %p337
      %p339 = scmp.ne.s32.totalorder %s331, %s333
      %p340 = scmp.eq.s32.totalorder %s43, 1
      %p341 = por %p339, %p340
      %p342 = scmp.ne.s32.totalorder %s333, %s334
      %p343 = scmp.eq.s32.totalorder %s43, 0
      %p344 = por %p342, %p343
      %p345 = scmp.ne.s32.totalorder %s333, %s334
      %p346 = scmp.eq.s32.totalorder %s44, 1
      %p347 = por %p345, %p346
      %p349 = scmp.ne.s32.totalorder %s334, %s348
      %p350 = scmp.eq.s32.totalorder %s44, 0
      %p351 = por %p349, %p350
      %s353 = sadd.s32 %s352, 1
      %p356 = scmp.eq.s32.totalorder %s38, 1
      %p357 = scmp.ne.s32.totalorder %s352, %s354
      %p358 = scmp.eq.s32.totalorder %s38, 0
      %p359 = por %p357, %p358
      %p360 = scmp.ne.s32.totalorder %s352, %s354
      %p361 = scmp.eq.s32.totalorder %s43, 1
      %p362 = por %p360, %p361
      %p363 = scmp.ne.s32.totalorder %s354, %s355
      %p364 = scmp.eq.s32.totalorder %s43, 0
      %p365 = por %p363, %p364
      %p366 = scmp.ne.s32.totalorder %s354, %s355
      %p367 = scmp.eq.s32.totalorder %s44, 1
      %p368 = por %p366, %p367
      %p370 = scmp.ne.s32.totalorder %s355, %s369
      %p371 = scmp.eq.s32.totalorder %s44, 0
      %p372 = por %p370, %p371
      %s374 = sadd.s32 %s373, 1
      %p377 = scmp.eq.s32.totalorder %s38, 1
      %p378 = scmp.ne.s32.totalorder %s373, %s375
      %p379 = scmp.eq.s32.totalorder %s38, 0
      %p380 = por %p378, %p379
      %p381 = scmp.ne.s32.totalorder %s373, %s375
      %p382 = scmp.eq.s32.totalorder %s43, 1
      %p383 = por %p381, %p382
      %p384 = scmp.ne.s32.totalorder %s375, %s376
      %p385 = scmp.eq.s32.totalorder %s43, 0
      %p386 = por %p384, %p385
      %p387 = scmp.ne.s32.totalorder %s375, %s376
      %p388 = scmp.eq.s32.totalorder %s44, 1
      %p389 = por %p387, %p388
      %p391 = scmp.ne.s32.totalorder %s376, %s390
      %p392 = scmp.eq.s32.totalorder %s44, 0
      %p393 = por %p391, %p392
      %s395 = sadd.s32 %s394, 1
      %p398 = scmp.eq.s32.totalorder %s38, 1
      %p399 = scmp.ne.s32.totalorder %s394, %s396
      %p400 = scmp.eq.s32.totalorder %s38, 0
      %p401 = por %p399, %p400
      %p402 = scmp.ne.s32.totalorder %s394, %s396
      %p403 = scmp.eq.s32.totalorder %s43, 1
      %p404 = por %p402, %p403
      %p405 = scmp.ne.s32.totalorder %s396, %s397
      %p406 = scmp.eq.s32.totalorder %s43, 0
      %p407 = por %p405, %p406
      %p408 = scmp.ne.s32.totalorder %s396, %s397
      %p409 = scmp.eq.s32.totalorder %s44, 1
      %p410 = por %p408, %p409
      %p412 = scmp.ne.s32.totalorder %s397, %s411
      %p413 = scmp.eq.s32.totalorder %s44, 0
      %p414 = por %p412, %p413
      %s416 = sadd.s32 %s415, 1
      %p419 = scmp.eq.s32.totalorder %s38, 1
      %p420 = scmp.ne.s32.totalorder %s415, %s417
      %p421 = scmp.eq.s32.totalorder %s38, 0
      %p422 = por %p420, %p421
      %p423 = scmp.ne.s32.totalorder %s415, %s417
      %p424 = scmp.eq.s32.totalorder %s43, 1
      %p425 = por %p423, %p424
      %p426 = scmp.ne.s32.totalorder %s417, %s418
      %p427 = scmp.eq.s32.totalorder %s43, 0
      %p428 = por %p426, %p427
      %p429 = scmp.ne.s32.totalorder %s417, %s418
      %p430 = scmp.eq.s32.totalorder %s44, 1
      %p431 = por %p429, %p430
      %p433 = scmp.ne.s32.totalorder %s418, %s432
      %p434 = scmp.eq.s32.totalorder %s44, 0
      %p435 = por %p433, %p434
      %s437 = sadd.s32 %s436, 1
      %p440 = scmp.eq.s32.totalorder %s38, 1
      %p441 = scmp.ne.s32.totalorder %s436, %s438
      %p442 = scmp.eq.s32.totalorder %s38, 0
      %p443 = por %p441, %p442
      %p444 = scmp.ne.s32.totalorder %s436, %s438
      %p445 = scmp.eq.s32.totalorder %s43, 1
      %p446 = por %p444, %p445
      %p447 = scmp.ne.s32.totalorder %s438, %s439
      %p448 = scmp.eq.s32.totalorder %s43, 0
      %p449 = por %p447, %p448
      %p450 = scmp.ne.s32.totalorder %s438, %s439
      %p451 = scmp.eq.s32.totalorder %s44, 1
      %p452 = por %p450, %p451
      %p454 = scmp.ne.s32.totalorder %s439, %s453
      %p455 = scmp.eq.s32.totalorder %s44, 0
      %p456 = por %p454, %p455
      %s458 = sadd.s32 %s457, 1
      %p461 = scmp.eq.s32.totalorder %s38, 1
      %p462 = scmp.ne.s32.totalorder %s457, %s459
      %p463 = scmp.eq.s32.totalorder %s38, 0
      %p464 = por %p462, %p463
      %p465 = scmp.ne.s32.totalorder %s457, %s459
      %p466 = scmp.eq.s32.totalorder %s43, 1
      %p467 = por %p465, %p466
      %p468 = scmp.ne.s32.totalorder %s459, %s460
      %p469 = scmp.eq.s32.totalorder %s43, 0
      %p470 = por %p468, %p469
      %p471 = scmp.ne.s32.totalorder %s459, %s460
      %p472 = scmp.eq.s32.totalorder %s44, 1
      %p473 = por %p471, %p472
      %p475 = scmp.ne.s32.totalorder %s460, %s474
      %p476 = scmp.eq.s32.totalorder %s44, 0
      %p477 = por %p475, %p476
      %s479 = sadd.s32 %s478, 1
      %p482 = scmp.eq.s32.totalorder %s38, 1
      %p483 = scmp.ne.s32.totalorder %s478, %s480
      %p484 = scmp.eq.s32.totalorder %s38, 0
      %p485 = por %p483, %p484
      %p486 = scmp.ne.s32.totalorder %s478, %s480
      %p487 = scmp.eq.s32.totalorder %s43, 1
      %p488 = por %p486, %p487
      %p489 = scmp.ne.s32.totalorder %s480, %s481
      %p490 = scmp.eq.s32.totalorder %s43, 0
      %p491 = por %p489, %p490
      %p492 = scmp.ne.s32.totalorder %s480, %s481
      %p493 = scmp.eq.s32.totalorder %s44, 1
      %p494 = por %p492, %p493
      %p496 = scmp.ne.s32.totalorder %s481, %s495
      %p497 = scmp.eq.s32.totalorder %s44, 0
      %p498 = por %p496, %p497
      %s499 = smul.u32 %s46, %s45
      %s500 = smul.u32 %s53, %s57
      %s501 = ssub.s32 %s499, %s500
      %p502 = scmp.eq.s32.totalorder %s501, 0
      %s504 = sadd.s32 %s503, 1
      %s505 = scalar_select %p502, %s503, %s504
      %p508 = pneg %p502
      %p509 = scmp.eq.s32.totalorder %s38, 1
      %p510 = por %p508, %p509
      %p511 = scmp.ne.s32.totalorder %s503, %s506
      %p512 = scmp.eq.s32.totalorder %s38, 0
      %p513 = por %p511, %p512
      %p514 = scmp.ne.s32.totalorder %s503, %s506
      %p515 = scmp.eq.s32.totalorder %s43, 1
      %p516 = por %p514, %p515
      %p517 = scmp.ne.s32.totalorder %s506, %s507
      %p518 = scmp.eq.s32.totalorder %s43, 0
      %p519 = por %p517, %p518
      %p520 = scmp.ne.s32.totalorder %s506, %s507
      %p521 = scmp.eq.s32.totalorder %s44, 1
      %p522 = por %p520, %p521
      %p524 = scmp.ne.s32.totalorder %s507, %s523
      %p525 = scmp.eq.s32.totalorder %s44, 0
      %p526 = por %p524, %p525
      %p527 = scmp.le.s32.totalorder 1, %s38
      %p528 = scmp.lt.s32.totalorder %s38, 3
      %p529 = pnand %p527, %p528
      %p530 = pneg %p529
      // Predicated region
      $region9: #{tpu_custom_call.1} parent=5 // pred_check
        _
      $region10: #{tpu_custom_call.1} parent=5 // pred_check_branch
        %532 = sbr.rel (%p529) target = $region12
      $region11: #{tpu_custom_call.1} parent=5 // pred_region
        %s533 = ssub.s32 %s38, 1
        // Predicated region
        $region13: #{tpu_custom_call.1} parent=11 // pred_check
          %p534 = pneg %p71
        $region14: #{tpu_custom_call.1} parent=11 // pred_check_branch
          %536 = sbr.rel (%p534) target = $region16
        $region15: #{tpu_custom_call.1} parent=11 // pred_region
          %538 = vsyncadd [#allocation9], 0
          %s540 = sshll.u32 %s0, 4
          %s541 = int_to_ptr.hbm [resolvable:$true] %s540
          %s542 = sshll.u32 [#allocation8], 4
          %s543 = int_to_ptr.vmem [resolvable:$true] %s542
          %545 = dma.hbm_to_vmem [thread:$0]  %s541, 128, %s543, [#allocation9]
        $region16: #{tpu_custom_call.1} parent=11 // pred_fallthru
          _
        // Predicated region
        $region17: #{tpu_custom_call.1} parent=11 // pred_check
          %p546 = pneg %p92
        $region18: #{tpu_custom_call.1} parent=11 // pred_check_branch
          %548 = sbr.rel (%p546) target = $region20
        $region19: #{tpu_custom_call.1} parent=11 // pred_region
          %550 = vsyncadd [#allocation12], 0
          %s552 = sshll.u32 %s1, 4
          %s553 = int_to_ptr.hbm [resolvable:$true] %s552
          %s554 = sshll.u32 [#allocation11], 4
          %s555 = int_to_ptr.vmem [resolvable:$true] %s554
          %557 = dma.hbm_to_vmem [thread:$0]  %s553, 128, %s555, [#allocation12]
        $region20: #{tpu_custom_call.1} parent=11 // pred_fallthru
          _
        // Predicated region
        $region21: #{tpu_custom_call.1} parent=11 // pred_check
          %p558 = pneg %p113
        $region22: #{tpu_custom_call.1} parent=11 // pred_check_branch
          %560 = sbr.rel (%p558) target = $region24
        $region23: #{tpu_custom_call.1} parent=11 // pred_region
          %562 = vsyncadd [#allocation12], 0
          %s564 = sshll.u32 %s2, 4
          %s565 = int_to_ptr.hbm [resolvable:$true] %s564
          %s566 = sshll.u32 [#allocation13], 4
          %s567 = int_to_ptr.vmem [resolvable:$true] %s566
          %569 = dma.hbm_to_vmem [thread:$0]  %s565, 128, %s567, [#allocation12]
        $region24: #{tpu_custom_call.1} parent=11 // pred_fallthru
          _
        // Predicated region
        $region25: #{tpu_custom_call.1} parent=11 // pred_check
          %p570 = pneg %p139
        $region26: #{tpu_custom_call.1} parent=11 // pred_check_branch
          %572 = sbr.rel (%p570) target = $region28
        $region27: #{tpu_custom_call.1} parent=11 // pred_region
          %574 = vsyncadd [#allocation15], 0
          %s575 = smul.addr %s48, 8
          %s576 = scalar_lea.hbm %s3, %s575
          %s578 = sshll.u32 %s576, 4
          %s579 = int_to_ptr.hbm [resolvable:$true] %s578
          %s580 = sshll.u32 [#allocation14], 4
          %s581 = int_to_ptr.vmem [resolvable:$true] %s580
          %583 = dma.hbm_to_vmem [thread:$0]  %s579, 128, %s581, [#allocation15]
        $region28: #{tpu_custom_call.1} parent=11 // pred_fallthru
          _
        // Predicated region
        $region29: #{tpu_custom_call.1} parent=11 // pred_check
          %p584 = pneg %p218
        $region30: #{tpu_custom_call.1} parent=11 // pred_check_branch
          %586 = sbr.rel (%p584) target = $region32
        $region31: #{tpu_custom_call.1} parent=11 // pred_region
          %588 = vsyncadd [#allocation12], 0
          %s590 = sshll.u32 %s6, 4
          %s591 = int_to_ptr.hbm [resolvable:$true] %s590
          %s592 = sshll.u32 [#allocation18], 4
          %s593 = int_to_ptr.vmem [resolvable:$true] %s592
          %595 = dma.hbm_to_vmem [thread:$0]  %s591, 128, %s593, [#allocation12]
        $region32: #{tpu_custom_call.1} parent=11 // pred_fallthru
          _
        // Predicated region
        $region33: #{tpu_custom_call.1} parent=11 // pred_check
          %p596 = pneg %p239
        $region34: #{tpu_custom_call.1} parent=11 // pred_check_branch
          %598 = sbr.rel (%p596) target = $region36
        $region35: #{tpu_custom_call.1} parent=11 // pred_region
          %600 = vsyncadd [#allocation15], 0
          %s602 = sshll.u32 %s7, 4
          %s603 = int_to_ptr.hbm [resolvable:$true] %s602
          %s604 = sshll.u32 [#allocation19], 4
          %s605 = int_to_ptr.vmem [resolvable:$true] %s604
          %607 = dma.hbm_to_vmem [thread:$0]  %s603, 128, %s605, [#allocation15]
        $region36: #{tpu_custom_call.1} parent=11 // pred_fallthru
          _
        // Predicated region
        $region37: #{tpu_custom_call.1} parent=11 // pred_check
          %p608 = pneg %p260
        $region38: #{tpu_custom_call.1} parent=11 // pred_check_branch
          %610 = sbr.rel (%p608) target = $region40
        $region39: #{tpu_custom_call.1} parent=11 // pred_region
          %612 = vsyncadd [#allocation21], 0
          %s614 = sshll.u32 %s8, 4
          %s615 = int_to_ptr.hbm [resolvable:$true] %s614
          %s616 = sshll.u32 [#allocation20], 4
          %s617 = int_to_ptr.vmem [resolvable:$true] %s616
          %619 = dma.hbm_to_vmem [thread:$0]  %s615, 128, %s617, [#allocation21]
        $region40: #{tpu_custom_call.1} parent=11 // pred_fallthru
          _
        // Predicated region
        $region41: #{tpu_custom_call.1} parent=11 // pred_check
          %p620 = pneg %p281
        $region42: #{tpu_custom_call.1} parent=11 // pred_check_branch
          %622 = sbr.rel (%p620) target = $region44
        $region43: #{tpu_custom_call.1} parent=11 // pred_region
          %624 = vsyncadd [#allocation21], 0
          %s625 = sshll.u32 %s9, 4
          %s626 = int_to_ptr.hbm [resolvable:$true] %s625
          %s627 = sshll.u32 [#allocation22], 4
          %s628 = int_to_ptr.vmem [resolvable:$true] %s627
          %633 = dma.hbm_to_vmem [thread:$0]  %s626, 2048, %s628, [#allocation21], 128, 128, 8
        $region44: #{tpu_custom_call.1} parent=11 // pred_fallthru
          _
        // Predicated region
        $region45: #{tpu_custom_call.1} parent=11 // pred_check
          %p634 = pneg %p302
        $region46: #{tpu_custom_call.1} parent=11 // pred_check_branch
          %636 = sbr.rel (%p634) target = $region48
        $region47: #{tpu_custom_call.1} parent=11 // pred_region
          %638 = vsyncadd [#allocation24], 0
          %s639 = sshll.u32 %s10, 4
          %s640 = int_to_ptr.hbm [resolvable:$true] %s639
          %s641 = sshll.u32 [#allocation23], 4
          %s642 = int_to_ptr.vmem [resolvable:$true] %s641
          %647 = dma.hbm_to_vmem [thread:$0]  %s640, 2048, %s642, [#allocation24], 128, 128, 8
        $region48: #{tpu_custom_call.1} parent=11 // pred_fallthru
          _
        // Predicated region
        $region49: #{tpu_custom_call.1} parent=11 // pred_check
          %p648 = pneg %p323
        $region50: #{tpu_custom_call.1} parent=11 // pred_check_branch
          %650 = sbr.rel (%p648) target = $region52
        $region51: #{tpu_custom_call.1} parent=11 // pred_region
          %652 = vsyncadd [#allocation24], 0
          %s653 = sshll.u32 %s11, 4
          %s654 = int_to_ptr.hbm [resolvable:$true] %s653
          %s655 = sshll.u32 [#allocation25], 4
          %s656 = int_to_ptr.vmem [resolvable:$true] %s655
          %661 = dma.hbm_to_vmem [thread:$0]  %s654, 2048, %s656, [#allocation24], 128, 128, 8
        $region52: #{tpu_custom_call.1} parent=11 // pred_fallthru
          _
        // Predicated region
        $region53: #{tpu_custom_call.1} parent=11 // pred_check
          %p662 = pneg %p344
        $region54: #{tpu_custom_call.1} parent=11 // pred_check_branch
          %664 = sbr.rel (%p662) target = $region56
        $region55: #{tpu_custom_call.1} parent=11 // pred_region
          %666 = vsyncadd [#allocation27], 0
          %s667 = sshll.u32 %s12, 4
          %s668 = int_to_ptr.hbm [resolvable:$true] %s667
          %s669 = sshll.u32 [#allocation26], 4
          %s670 = int_to_ptr.vmem [resolvable:$true] %s669
          %675 = dma.hbm_to_vmem [thread:$0]  %s668, 8192, %s670, [#allocation27], 512, 512, 32
        $region56: #{tpu_custom_call.1} parent=11 // pred_fallthru
          _
        // Predicated region
        $region57: #{tpu_custom_call.1} parent=11 // pred_check
          %p676 = pneg %p365
        $region58: #{tpu_custom_call.1} parent=11 // pred_check_branch
          %678 = sbr.rel (%p676) target = $region60
        $region59: #{tpu_custom_call.1} parent=11 // pred_region
          %680 = vsyncadd [#allocation27], 0
          %s681 = sshll.u32 %s13, 4
          %s682 = int_to_ptr.hbm [resolvable:$true] %s681
          %s683 = sshll.u32 [#allocation28], 4
          %s684 = int_to_ptr.vmem [resolvable:$true] %s683
          %689 = dma.hbm_to_vmem [thread:$0]  %s682, 2048, %s684, [#allocation27], 128, 128, 8
        $region60: #{tpu_custom_call.1} parent=11 // pred_fallthru
          _
        // Predicated region
        $region61: #{tpu_custom_call.1} parent=11 // pred_check
          %p690 = pneg %p386
        $region62: #{tpu_custom_call.1} parent=11 // pred_check_branch
          %692 = sbr.rel (%p690) target = $region64
        $region63: #{tpu_custom_call.1} parent=11 // pred_region
          %694 = vsyncadd [#allocation30], 0
          %s695 = sshll.u32 %s14, 4
          %s696 = int_to_ptr.hbm [resolvable:$true] %s695
          %s697 = sshll.u32 [#allocation29], 4
          %s698 = int_to_ptr.vmem [resolvable:$true] %s697
          %703 = dma.hbm_to_vmem [thread:$0]  %s696, 2048, %s698, [#allocation30], 128, 128, 8
        $region64: #{tpu_custom_call.1} parent=11 // pred_fallthru
          _
        // Predicated region
        $region65: #{tpu_custom_call.1} parent=11 // pred_check
          %p704 = pneg %p407
        $region66: #{tpu_custom_call.1} parent=11 // pred_check_branch
          %706 = sbr.rel (%p704) target = $region68
        $region67: #{tpu_custom_call.1} parent=11 // pred_region
          _
        $region68: #{tpu_custom_call.1} parent=11 // pred_fallthru
          _
        // Predicated region
        $region69: #{tpu_custom_call.1} parent=11 // pred_check
          %p707 = pneg %p428
        $region70: #{tpu_custom_call.1} parent=11 // pred_check_branch
          %709 = sbr.rel (%p707) target = $region72
        $region71: #{tpu_custom_call.1} parent=11 // pred_region
          %711 = vsyncadd [#allocation30], 0
          %s712 = sshll.u32 %s16, 4
          %s713 = int_to_ptr.hbm [resolvable:$true] %s712
          %s714 = sshll.u32 [#allocation31], 4
          %s715 = int_to_ptr.vmem [resolvable:$true] %s714
          %720 = dma.hbm_to_vmem [thread:$0]  %s713, 2048, %s715, [#allocation30], 128, 128, 8
        $region72: #{tpu_custom_call.1} parent=11 // pred_fallthru
          _
        // Predicated region
        $region73: #{tpu_custom_call.1} parent=11 // pred_check
          %p721 = pneg %p449
        $region74: #{tpu_custom_call.1} parent=11 // pred_check_branch
          %723 = sbr.rel (%p721) target = $region76
        $region75: #{tpu_custom_call.1} parent=11 // pred_region
          %725 = vsyncadd [#allocation33], 0
          %s726 = sshll.u32 %s17, 4
          %s727 = int_to_ptr.hbm [resolvable:$true] %s726
          %s728 = sshll.u32 [#allocation32], 4
          %s729 = int_to_ptr.vmem [resolvable:$true] %s728
          %734 = dma.hbm_to_vmem [thread:$0]  %s727, 2048, %s729, [#allocation33], 128, 128, 8
        $region76: #{tpu_custom_call.1} parent=11 // pred_fallthru
          _
        // Predicated region
        $region77: #{tpu_custom_call.1} parent=11 // pred_check
          %p735 = pneg %p470
        $region78: #{tpu_custom_call.1} parent=11 // pred_check_branch
          %737 = sbr.rel (%p735) target = $region80
        $region79: #{tpu_custom_call.1} parent=11 // pred_region
          %739 = vsyncadd [#allocation33], 0
          %s740 = sshll.u32 %s18, 4
          %s741 = int_to_ptr.hbm [resolvable:$true] %s740
          %s742 = sshll.u32 [#allocation34], 4
          %s743 = int_to_ptr.vmem [resolvable:$true] %s742
          %748 = dma.hbm_to_vmem [thread:$0]  %s741, 2048, %s743, [#allocation33], 128, 128, 8
        $region80: #{tpu_custom_call.1} parent=11 // pred_fallthru
          _
        // Predicated region
        $region81: #{tpu_custom_call.1} parent=11 // pred_check
          %p749 = pneg %p491
        $region82: #{tpu_custom_call.1} parent=11 // pred_check_branch
          %751 = sbr.rel (%p749) target = $region84
        $region83: #{tpu_custom_call.1} parent=11 // pred_region
          %753 = vsyncadd [#allocation36], 0
          %s754 = sshll.u32 %s19, 4
          %s755 = int_to_ptr.hbm [resolvable:$true] %s754
          %s756 = sshll.u32 [#allocation35], 4
          %s757 = int_to_ptr.vmem [resolvable:$true] %s756
          %762 = dma.hbm_to_vmem [thread:$0]  %s755, 8192, %s757, [#allocation36], 512, 512, 32
        $region84: #{tpu_custom_call.1} parent=11 // pred_fallthru
          _
      $region12: #{tpu_custom_call.1} parent=5 // pred_fallthru
        _
      %p763 = scmp.lt.s32.totalorder %s38, 2
      // Predicated region
      $region85: #{tpu_custom_call.1} parent=5 // pred_check
        %p764 = pneg %p763
      $region86: #{tpu_custom_call.1} parent=5 // pred_check_branch
        %766 = sbr.rel (%p764) target = $region88
      $region87: #{tpu_custom_call.1} parent=5 // pred_region
        // Predicated region
        $region89: #{tpu_custom_call.1} parent=87 // pred_check
          %p767 = pneg %p163
        $region90: #{tpu_custom_call.1} parent=87 // pred_check_branch
          %769 = sbr.rel (%p767) target = $region92
        $region91: #{tpu_custom_call.1} parent=87 // pred_region
          %s770 = sand.u32 %s38, 1
          %s771 = scalar_lea.sflag [#allocation9], %s770
          %s772 = sand.u32 %s153, 1
          %s773 = smul.addr %s772, 8
          %s774 = scalar_lea.vmem [#allocation16], %s773
          %s775 = ssub.s32 1, %s45
          %s776 = smul.u32 %s46, %s775
          %778 = vsyncadd %s771, 0
          %s779 = smul.addr %s776, 8
          %s780 = scalar_lea.hbm %s4, %s779
          %s782 = sshll.u32 %s780, 4
          %s783 = int_to_ptr.hbm [resolvable:$true] %s782
          %s784 = sshll.u32 %s774, 4
          %s785 = int_to_ptr.vmem [resolvable:$true] %s784
          %787 = dma.hbm_to_vmem [thread:$0]  %s783, 128, %s785, %s771
        $region92: #{tpu_custom_call.1} parent=87 // pred_fallthru
          _
        // Predicated region
        $region93: #{tpu_custom_call.1} parent=87 // pred_check
          %p788 = pneg %p191
        $region94: #{tpu_custom_call.1} parent=87 // pred_check_branch
          %790 = sbr.rel (%p788) target = $region96
        $region95: #{tpu_custom_call.1} parent=87 // pred_region
          %s791 = sand.u32 %s38, 1
          %s792 = scalar_lea.sflag [#allocation9], %s791
          %s793 = sand.u32 %s181, 1
          %s794 = smul.addr %s793, 8
          %s795 = scalar_lea.vmem [#allocation17], %s794
          %s796 = smul.u32 %s46, %s45
          %798 = vsyncadd %s792, 0
          %s799 = smul.addr %s796, 8
          %s800 = scalar_lea.hbm %s5, %s799
          %s802 = sshll.u32 %s800, 4
          %s803 = int_to_ptr.hbm [resolvable:$true] %s802
          %s804 = sshll.u32 %s795, 4
          %s805 = int_to_ptr.vmem [resolvable:$true] %s804
          %807 = dma.hbm_to_vmem [thread:$0]  %s803, 128, %s805, %s792
        $region96: #{tpu_custom_call.1} parent=87 // pred_fallthru
          _
      $region88: #{tpu_custom_call.1} parent=5 // pred_fallthru
        _
      %p808 = scmp.le.s32.totalorder 1, %s38
      %p809 = scmp.lt.s32.totalorder %s38, 3
      %p810 = pnand %p808, %p809
      %p811 = pneg %p810
      // Predicated region
      $region97: #{tpu_custom_call.1} parent=5 // pred_check
        _
      $region98: #{tpu_custom_call.1} parent=5 // pred_check_branch
        %813 = sbr.rel (%p810) target = $region100
      $region99: #{tpu_custom_call.1} parent=5 // pred_region
        %s814 = ssub.s32 %s38, 1
        // Predicated region
        $region101: #{tpu_custom_call.1} parent=99 // pred_check
          %p815 = pneg %p71
        $region102: #{tpu_custom_call.1} parent=99 // pred_check_branch
          %817 = sbr.rel (%p815) target = $region104
        $region103: #{tpu_custom_call.1} parent=99 // pred_region
          %819 = dma.done [#allocation9], 128
        $region104: #{tpu_custom_call.1} parent=99 // pred_fallthru
          _
        // Predicated region
        $region105: #{tpu_custom_call.1} parent=99 // pred_check
          %p820 = pneg %p92
        $region106: #{tpu_custom_call.1} parent=99 // pred_check_branch
          %822 = sbr.rel (%p820) target = $region108
        $region107: #{tpu_custom_call.1} parent=99 // pred_region
          %824 = dma.done [#allocation12], 128
        $region108: #{tpu_custom_call.1} parent=99 // pred_fallthru
          _
        // Predicated region
        $region109: #{tpu_custom_call.1} parent=99 // pred_check
          %p825 = pneg %p113
        $region110: #{tpu_custom_call.1} parent=99 // pred_check_branch
          %827 = sbr.rel (%p825) target = $region112
        $region111: #{tpu_custom_call.1} parent=99 // pred_region
          %829 = dma.done [#allocation12], 128
        $region112: #{tpu_custom_call.1} parent=99 // pred_fallthru
          _
        // Predicated region
        $region113: #{tpu_custom_call.1} parent=99 // pred_check
          %p830 = pneg %p139
        $region114: #{tpu_custom_call.1} parent=99 // pred_check_branch
          %832 = sbr.rel (%p830) target = $region116
        $region115: #{tpu_custom_call.1} parent=99 // pred_region
          %834 = dma.done [#allocation15], 128
        $region116: #{tpu_custom_call.1} parent=99 // pred_fallthru
          _
        %s835 = sand.u32 %s43, 1
        %s836 = scalar_lea.sflag [#allocation9], %s835
        %s837 = sand.u32 %s156, 1
        %s838 = smul.addr %s837, 8
        %s839 = scalar_lea.vmem [#allocation16], %s838
        // Predicated region
        $region117: #{tpu_custom_call.1} parent=99 // pred_check
          %p840 = pneg %p169
        $region118: #{tpu_custom_call.1} parent=99 // pred_check_branch
          %842 = sbr.rel (%p840) target = $region120
        $region119: #{tpu_custom_call.1} parent=99 // pred_region
          %844 = dma.done %s836, 128
        $region120: #{tpu_custom_call.1} parent=99 // pred_fallthru
          _
        %s845 = sand.u32 %s43, 1
        %s846 = scalar_lea.sflag [#allocation9], %s845
        %s847 = sand.u32 %s184, 1
        %s848 = smul.addr %s847, 8
        %s849 = scalar_lea.vmem [#allocation17], %s848
        // Predicated region
        $region121: #{tpu_custom_call.1} parent=99 // pred_check
          %p850 = pneg %p197
        $region122: #{tpu_custom_call.1} parent=99 // pred_check_branch
          %852 = sbr.rel (%p850) target = $region124
        $region123: #{tpu_custom_call.1} parent=99 // pred_region
          %854 = dma.done %s846, 128
        $region124: #{tpu_custom_call.1} parent=99 // pred_fallthru
          _
        // Predicated region
        $region125: #{tpu_custom_call.1} parent=99 // pred_check
          %p855 = pneg %p218
        $region126: #{tpu_custom_call.1} parent=99 // pred_check_branch
          %857 = sbr.rel (%p855) target = $region128
        $region127: #{tpu_custom_call.1} parent=99 // pred_region
          %859 = dma.done [#allocation12], 128
        $region128: #{tpu_custom_call.1} parent=99 // pred_fallthru
          _
        // Predicated region
        $region129: #{tpu_custom_call.1} parent=99 // pred_check
          %p860 = pneg %p239
        $region130: #{tpu_custom_call.1} parent=99 // pred_check_branch
          %862 = sbr.rel (%p860) target = $region132
        $region131: #{tpu_custom_call.1} parent=99 // pred_region
          %864 = dma.done [#allocation15], 128
        $region132: #{tpu_custom_call.1} parent=99 // pred_fallthru
          _
        // Predicated region
        $region133: #{tpu_custom_call.1} parent=99 // pred_check
          %p865 = pneg %p260
        $region134: #{tpu_custom_call.1} parent=99 // pred_check_branch
          %867 = sbr.rel (%p865) target = $region136
        $region135: #{tpu_custom_call.1} parent=99 // pred_region
          %869 = dma.done [#allocation21], 128
        $region136: #{tpu_custom_call.1} parent=99 // pred_fallthru
          _
        // Predicated region
        $region137: #{tpu_custom_call.1} parent=99 // pred_check
          %p870 = pneg %p281
        $region138: #{tpu_custom_call.1} parent=99 // pred_check_branch
          %872 = sbr.rel (%p870) target = $region140
        $region139: #{tpu_custom_call.1} parent=99 // pred_region
          %874 = dma.done [#allocation21], 2048
        $region140: #{tpu_custom_call.1} parent=99 // pred_fallthru
          _
        // Predicated region
        $region141: #{tpu_custom_call.1} parent=99 // pred_check
          %p875 = pneg %p302
        $region142: #{tpu_custom_call.1} parent=99 // pred_check_branch
          %877 = sbr.rel (%p875) target = $region144
        $region143: #{tpu_custom_call.1} parent=99 // pred_region
          %879 = dma.done [#allocation24], 2048
        $region144: #{tpu_custom_call.1} parent=99 // pred_fallthru
          _
        // Predicated region
        $region145: #{tpu_custom_call.1} parent=99 // pred_check
          %p880 = pneg %p323
        $region146: #{tpu_custom_call.1} parent=99 // pred_check_branch
          %882 = sbr.rel (%p880) target = $region148
        $region147: #{tpu_custom_call.1} parent=99 // pred_region
          %884 = dma.done [#allocation24], 2048
        $region148: #{tpu_custom_call.1} parent=99 // pred_fallthru
          _
        // Predicated region
        $region149: #{tpu_custom_call.1} parent=99 // pred_check
          %p885 = pneg %p344
        $region150: #{tpu_custom_call.1} parent=99 // pred_check_branch
          %887 = sbr.rel (%p885) target = $region152
        $region151: #{tpu_custom_call.1} parent=99 // pred_region
          %889 = dma.done [#allocation27], 8192
        $region152: #{tpu_custom_call.1} parent=99 // pred_fallthru
          _
        // Predicated region
        $region153: #{tpu_custom_call.1} parent=99 // pred_check
          %p890 = pneg %p365
        $region154: #{tpu_custom_call.1} parent=99 // pred_check_branch
          %892 = sbr.rel (%p890) target = $region156
        $region155: #{tpu_custom_call.1} parent=99 // pred_region
          %894 = dma.done [#allocation27], 2048
        $region156: #{tpu_custom_call.1} parent=99 // pred_fallthru
          _
        // Predicated region
        $region157: #{tpu_custom_call.1} parent=99 // pred_check
          %p895 = pneg %p386
        $region158: #{tpu_custom_call.1} parent=99 // pred_check_branch
          %897 = sbr.rel (%p895) target = $region160
        $region159: #{tpu_custom_call.1} parent=99 // pred_region
          %899 = dma.done [#allocation30], 2048
        $region160: #{tpu_custom_call.1} parent=99 // pred_fallthru
          _
        // Predicated region
        $region161: #{tpu_custom_call.1} parent=99 // pred_check
          %p900 = pneg %p428
        $region162: #{tpu_custom_call.1} parent=99 // pred_check_branch
          %902 = sbr.rel (%p900) target = $region164
        $region163: #{tpu_custom_call.1} parent=99 // pred_region
          %904 = dma.done [#allocation30], 2048
        $region164: #{tpu_custom_call.1} parent=99 // pred_fallthru
          _
        // Predicated region
        $region165: #{tpu_custom_call.1} parent=99 // pred_check
          %p905 = pneg %p449
        $region166: #{tpu_custom_call.1} parent=99 // pred_check_branch
          %907 = sbr.rel (%p905) target = $region168
        $region167: #{tpu_custom_call.1} parent=99 // pred_region
          %909 = dma.done [#allocation33], 2048
        $region168: #{tpu_custom_call.1} parent=99 // pred_fallthru
          _
        // Predicated region
        $region169: #{tpu_custom_call.1} parent=99 // pred_check
          %p910 = pneg %p470
        $region170: #{tpu_custom_call.1} parent=99 // pred_check_branch
          %912 = sbr.rel (%p910) target = $region172
        $region171: #{tpu_custom_call.1} parent=99 // pred_region
          %914 = dma.done [#allocation33], 2048
        $region172: #{tpu_custom_call.1} parent=99 // pred_fallthru
          _
        // Predicated region
        $region173: #{tpu_custom_call.1} parent=99 // pred_check
          %p915 = pneg %p491
        $region174: #{tpu_custom_call.1} parent=99 // pred_check_branch
          %917 = sbr.rel (%p915) target = $region176
        $region175: #{tpu_custom_call.1} parent=99 // pred_region
          %919 = dma.done [#allocation36], 8192
        $region176: #{tpu_custom_call.1} parent=99 // pred_fallthru
          _
        %p920 = pneg %p71
        %p921 = pneg %p68
        %p922 = pneg %p92
        %p923 = pneg %p89
        %p924 = pneg %p113
        %p925 = pneg %p110
        %p926 = pneg %p139
        %p927 = pneg %p136
        %s928 = sand.u32 %s43, 1
        %s929 = scalar_lea.sflag [#allocation9], %s928
        %s930 = sand.u32 %s156, 1
        %s931 = smul.addr %s930, 8
        %s932 = scalar_lea.vmem [#allocation16], %s931
        %p933 = pneg %p169
        %p934 = pneg %p166
        %s935 = sand.u32 %s43, 1
        %s936 = scalar_lea.sflag [#allocation9], %s935
        %s937 = sand.u32 %s184, 1
        %s938 = smul.addr %s937, 8
        %s939 = scalar_lea.vmem [#allocation17], %s938
        %p940 = pneg %p197
        %p941 = pneg %p194
        %p942 = pneg %p218
        %p943 = pneg %p215
        %p944 = pneg %p239
        %p945 = pneg %p236
        %p946 = pneg %p260
        %p947 = pneg %p257
        %p948 = pneg %p281
        %p949 = pneg %p278
        %p950 = pneg %p302
        %p951 = pneg %p299
        %p952 = pneg %p323
        %p953 = pneg %p320
        %p954 = pneg %p344
        %p955 = pneg %p341
        %p956 = pneg %p365
        %p957 = pneg %p362
        %p958 = pneg %p386
        %p959 = pneg %p383
        %p960 = pneg %p407
        %p961 = pneg %p404
        %p962 = pneg %p428
        %p963 = pneg %p425
        %p964 = pneg %p449
        %p965 = pneg %p446
        %p966 = pneg %p470
        %p967 = pneg %p467
        %p968 = pneg %p491
        %p969 = pneg %p488
        %p970 = pneg %p519
        %p971 = pneg %p516
        %s972 = sand.u32 %s506, 1
        %s973 = scalar_lea.sflag [#allocation10], %s972
        %s974 = sand.u32 %s506, 1
        %s975 = smul.addr %s974, 8
        %s976 = scalar_lea.vmem [#allocation37], %s975
        %s977 = ssub.s32 1, %s47
        %s978 = smul.u32 %s48, %s977
        %s979 = smul.u32 %s48, %s47
        %s980 = smul.u32 %s48, %s47
        %s981 = smul.u32 %s48, 8
        %p982 = scmp.eq.s32.totalorder %s47, 0
        // Predicated region
        $region177: #{tpu_custom_call.1} parent=99 // pred_check
          %p983 = pneg %p982
        $region178: #{tpu_custom_call.1} parent=99 // pred_check_branch
          %985 = sbr.rel (%p983) target = $region180
        $region179: #{tpu_custom_call.1} parent=99 // pred_region
          %p986 = scmp.eq.s32.totalorder %s48, 0
          // Predicated region
          $region181: #{tpu_custom_call.1} parent=179 // pred_check
            %p987 = pneg %p986
          $region182: #{tpu_custom_call.1} parent=179 // pred_check_branch
            %989 = sbr.rel (%p987) target = $region184
          $region183: #{tpu_custom_call.1} parent=179 // pred_region
            %v990 = vld [vmem:[#allocation18] sm:$0xff]
            %v991 = vld [vmem:[#allocation22] sm:$0xff]
            %v992 = vld [vmem:[#allocation22 + $0x8] sm:$0xff]
            %v993 = vld [vmem:[#allocation22 + $0x10] sm:$0xff]
            %v994 = vld [vmem:[#allocation22 + $0x18] sm:$0xff]
            %v995 = vld [vmem:[#allocation22 + $0x20] sm:$0xff]
            %v996 = vld [vmem:[#allocation22 + $0x28] sm:$0xff]
            %v997 = vld [vmem:[#allocation22 + $0x30] sm:$0xff]
            %v998 = vld [vmem:[#allocation22 + $0x38] sm:$0xff]
            %v999 = vld [vmem:[#allocation22 + $0x40] sm:$0xff]
            %v1000 = vld [vmem:[#allocation22 + $0x48] sm:$0xff]
            %v1001 = vld [vmem:[#allocation22 + $0x50] sm:$0xff]
            %v1002 = vld [vmem:[#allocation22 + $0x58] sm:$0xff]
            %v1003 = vld [vmem:[#allocation22 + $0x60] sm:$0xff]
            %v1004 = vld [vmem:[#allocation22 + $0x68] sm:$0xff]
            %v1005 = vld [vmem:[#allocation22 + $0x70] sm:$0xff]
            %v1006 = vld [vmem:[#allocation22 + $0x78] sm:$0xff]
            %1007 = vmatpush.msra.mxu0 %v1006
            %1008 = vmatpush.msra.mxu0 %v1005
            %1009 = vmatpush.msra.mxu0 %v1004
            %1010 = vmatpush.msra.mxu0 %v1003
            %1011 = vmatpush.msra.mxu0 %v1002
            %1012 = vmatpush.msra.mxu0 %v1001
            %1013 = vmatpush.msra.mxu0 %v1000
            %1014 = vmatpush.msra.mxu0 %v999
            %1015 = vmatpush.msra.mxu0 %v998
            %1016 = vmatpush.msra.mxu0 %v997
            %1017 = vmatpush.msra.mxu0 %v996
            %1018 = vmatpush.msra.mxu0 %v995
            %1019 = vmatpush.msra.mxu0 %v994
            %1020 = vmatpush.msra.mxu0 %v993
            %1021 = vmatpush.msra.mxu0 %v992
            %1022 = vmatpush.msra.mxu0 %v991
            %1023 = vmatmul.f32.gmra.mxu0 %v990
            %v1024 = vpop.f32.mrf.mxu0
            %v1025 = vadd.f32 0.0, %v1024
            %1026 = vdwg.mxu0
            %1027 = vst [vmem:[#allocation5] sm:$0xff] %v1025
            %v1028 = vld [vmem:[#allocation19] sm:$0xff]
            %v1029 = vld [vmem:[#allocation23] sm:$0xff]
            %v1030 = vld [vmem:[#allocation23 + $0x8] sm:$0xff]
            %v1031 = vld [vmem:[#allocation23 + $0x10] sm:$0xff]
            %v1032 = vld [vmem:[#allocation23 + $0x18] sm:$0xff]
            %v1033 = vld [vmem:[#allocation23 + $0x20] sm:$0xff]
            %v1034 = vld [vmem:[#allocation23 + $0x28] sm:$0xff]
            %v1035 = vld [vmem:[#allocation23 + $0x30] sm:$0xff]
            %v1036 = vld [vmem:[#allocation23 + $0x38] sm:$0xff]
            %v1037 = vld [vmem:[#allocation23 + $0x40] sm:$0xff]
            %v1038 = vld [vmem:[#allocation23 + $0x48] sm:$0xff]
            %v1039 = vld [vmem:[#allocation23 + $0x50] sm:$0xff]
            %v1040 = vld [vmem:[#allocation23 + $0x58] sm:$0xff]
            %v1041 = vld [vmem:[#allocation23 + $0x60] sm:$0xff]
            %v1042 = vld [vmem:[#allocation23 + $0x68] sm:$0xff]
            %v1043 = vld [vmem:[#allocation23 + $0x70] sm:$0xff]
            %v1044 = vld [vmem:[#allocation23 + $0x78] sm:$0xff]
            %1045 = vmatpush.msra.mxu0 %v1044
            %1046 = vmatpush.msra.mxu0 %v1043
            %1047 = vmatpush.msra.mxu0 %v1042
            %1048 = vmatpush.msra.mxu0 %v1041
            %1049 = vmatpush.msra.mxu0 %v1040
            %1050 = vmatpush.msra.mxu0 %v1039
            %1051 = vmatpush.msra.mxu0 %v1038
            %1052 = vmatpush.msra.mxu0 %v1037
            %1053 = vmatpush.msra.mxu0 %v1036
            %1054 = vmatpush.msra.mxu0 %v1035
            %1055 = vmatpush.msra.mxu0 %v1034
            %1056 = vmatpush.msra.mxu0 %v1033
            %1057 = vmatpush.msra.mxu0 %v1032
            %1058 = vmatpush.msra.mxu0 %v1031
            %1059 = vmatpush.msra.mxu0 %v1030
            %1060 = vmatpush.msra.mxu0 %v1029
            %1061 = vmatmul.f32.gmra.mxu0 %v1028
            %v1062 = vpop.f32.mrf.mxu0
            %v1063 = vadd.f32 0.0, %v1062
            %1064 = vdwg.mxu0
            %1065 = vst [vmem:[#allocation6] sm:$0xff] %v1063
            %v1066 = vld [vmem:[#allocation20] sm:$0xff]
            %v1067 = vld [vmem:[#allocation25] sm:$0xff]
            %v1068 = vld [vmem:[#allocation25 + $0x8] sm:$0xff]
            %v1069 = vld [vmem:[#allocation25 + $0x10] sm:$0xff]
            %v1070 = vld [vmem:[#allocation25 + $0x18] sm:$0xff]
            %v1071 = vld [vmem:[#allocation25 + $0x20] sm:$0xff]
            %v1072 = vld [vmem:[#allocation25 + $0x28] sm:$0xff]
            %v1073 = vld [vmem:[#allocation25 + $0x30] sm:$0xff]
            %v1074 = vld [vmem:[#allocation25 + $0x38] sm:$0xff]
            %v1075 = vld [vmem:[#allocation25 + $0x40] sm:$0xff]
            %v1076 = vld [vmem:[#allocation25 + $0x48] sm:$0xff]
            %v1077 = vld [vmem:[#allocation25 + $0x50] sm:$0xff]
            %v1078 = vld [vmem:[#allocation25 + $0x58] sm:$0xff]
            %v1079 = vld [vmem:[#allocation25 + $0x60] sm:$0xff]
            %v1080 = vld [vmem:[#allocation25 + $0x68] sm:$0xff]
            %v1081 = vld [vmem:[#allocation25 + $0x70] sm:$0xff]
            %v1082 = vld [vmem:[#allocation25 + $0x78] sm:$0xff]
            %1083 = vmatpush.msra.mxu0 %v1082
            %1084 = vmatpush.msra.mxu0 %v1081
            %1085 = vmatpush.msra.mxu0 %v1080
            %1086 = vmatpush.msra.mxu0 %v1079
            %1087 = vmatpush.msra.mxu0 %v1078
            %1088 = vmatpush.msra.mxu0 %v1077
            %1089 = vmatpush.msra.mxu0 %v1076
            %1090 = vmatpush.msra.mxu0 %v1075
            %1091 = vmatpush.msra.mxu0 %v1074
            %1092 = vmatpush.msra.mxu0 %v1073
            %1093 = vmatpush.msra.mxu0 %v1072
            %1094 = vmatpush.msra.mxu0 %v1071
            %1095 = vmatpush.msra.mxu0 %v1070
            %1096 = vmatpush.msra.mxu0 %v1069
            %1097 = vmatpush.msra.mxu0 %v1068
            %1098 = vmatpush.msra.mxu0 %v1067
            %1099 = vmatmul.f32.gmra.mxu0 %v1066
            %v1100 = vpop.f32.mrf.mxu0
            %v1101 = vadd.f32 0.0, %v1100
            %1102 = vdwg.mxu0
            %1103 = vst [vmem:[#allocation7] sm:$0xff] %v1101
            %v1104 = vld [vmem:[#allocation19] sm:$0xff]
            %v1105 = vld [vmem:[#allocation28] sm:$0xff]
            %v1106 = vld [vmem:[#allocation28 + $0x8] sm:$0xff]
            %v1107 = vld [vmem:[#allocation28 + $0x10] sm:$0xff]
            %v1108 = vld [vmem:[#allocation28 + $0x18] sm:$0xff]
            %v1109 = vld [vmem:[#allocation28 + $0x20] sm:$0xff]
            %v1110 = vld [vmem:[#allocation28 + $0x28] sm:$0xff]
            %v1111 = vld [vmem:[#allocation28 + $0x30] sm:$0xff]
            %v1112 = vld [vmem:[#allocation28 + $0x38] sm:$0xff]
            %v1113 = vld [vmem:[#allocation28 + $0x40] sm:$0xff]
            %v1114 = vld [vmem:[#allocation28 + $0x48] sm:$0xff]
            %v1115 = vld [vmem:[#allocation28 + $0x50] sm:$0xff]
            %v1116 = vld [vmem:[#allocation28 + $0x58] sm:$0xff]
            %v1117 = vld [vmem:[#allocation28 + $0x60] sm:$0xff]
            %v1118 = vld [vmem:[#allocation28 + $0x68] sm:$0xff]
            %v1119 = vld [vmem:[#allocation28 + $0x70] sm:$0xff]
            %v1120 = vld [vmem:[#allocation28 + $0x78] sm:$0xff]
            %v1121 = vld [vmem:[%s15] sm:$0x1]
            %v1122 = vperm.slane %v1121, 0
            %1123 = vmatpush.msra.mxu0 %v1120
            %1124 = vmatpush.msra.mxu0 %v1119
            %1125 = vmatpush.msra.mxu0 %v1118
            %1126 = vmatpush.msra.mxu0 %v1117
            %1127 = vmatpush.msra.mxu0 %v1116
            %1128 = vmatpush.msra.mxu0 %v1115
            %1129 = vmatpush.msra.mxu0 %v1114
            %1130 = vmatpush.msra.mxu0 %v1113
            %1131 = vmatpush.msra.mxu0 %v1112
            %1132 = vmatpush.msra.mxu0 %v1111
            %1133 = vmatpush.msra.mxu0 %v1110
            %1134 = vmatpush.msra.mxu0 %v1109
            %1135 = vmatpush.msra.mxu0 %v1108
            %1136 = vmatpush.msra.mxu0 %v1107
            %1137 = vmatpush.msra.mxu0 %v1106
            %1138 = vmatpush.msra.mxu0 %v1105
            %1139 = vmatmul.f32.gmra.mxu0 %v1104
            %v1140 = vpop.f32.mrf.mxu0
            %v1141 = vadd.f32 %v1122, %v1140
            %1142 = vdwg.mxu0
            %1143 = vst [vmem:[#allocation3] sm:$0xff] %v1141
            %v1144 = vld [vmem:[#allocation20] sm:$0xff]
            %v1145 = vld [vmem:[#allocation29] sm:$0xff]
            %v1146 = vld [vmem:[#allocation29 + $0x8] sm:$0xff]
            %v1147 = vld [vmem:[#allocation29 + $0x10] sm:$0xff]
            %v1148 = vld [vmem:[#allocation29 + $0x18] sm:$0xff]
            %v1149 = vld [vmem:[#allocation29 + $0x20] sm:$0xff]
            %v1150 = vld [vmem:[#allocation29 + $0x28] sm:$0xff]
            %v1151 = vld [vmem:[#allocation29 + $0x30] sm:$0xff]
            %v1152 = vld [vmem:[#allocation29 + $0x38] sm:$0xff]
            %v1153 = vld [vmem:[#allocation29 + $0x40] sm:$0xff]
            %v1154 = vld [vmem:[#allocation29 + $0x48] sm:$0xff]
            %v1155 = vld [vmem:[#allocation29 + $0x50] sm:$0xff]
            %v1156 = vld [vmem:[#allocation29 + $0x58] sm:$0xff]
            %v1157 = vld [vmem:[#allocation29 + $0x60] sm:$0xff]
            %v1158 = vld [vmem:[#allocation29 + $0x68] sm:$0xff]
            %v1159 = vld [vmem:[#allocation29 + $0x70] sm:$0xff]
            %v1160 = vld [vmem:[#allocation29 + $0x78] sm:$0xff]
            %v1161 = vld [vmem:[%s15 + $0x1] sm:$0x1]
            %v1162 = vperm.slane %v1161, 0
            %1163 = vmatpush.msra.mxu0 %v1160
            %1164 = vmatpush.msra.mxu0 %v1159
            %1165 = vmatpush.msra.mxu0 %v1158
            %1166 = vmatpush.msra.mxu0 %v1157
            %1167 = vmatpush.msra.mxu0 %v1156
            %1168 = vmatpush.msra.mxu0 %v1155
            %1169 = vmatpush.msra.mxu0 %v1154
            %1170 = vmatpush.msra.mxu0 %v1153
            %1171 = vmatpush.msra.mxu0 %v1152
            %1172 = vmatpush.msra.mxu0 %v1151
            %1173 = vmatpush.msra.mxu0 %v1150
            %1174 = vmatpush.msra.mxu0 %v1149
            %1175 = vmatpush.msra.mxu0 %v1148
            %1176 = vmatpush.msra.mxu0 %v1147
            %1177 = vmatpush.msra.mxu0 %v1146
            %1178 = vmatpush.msra.mxu0 %v1145
            %1179 = vmatmul.f32.gmra.mxu0 %v1144
            %v1180 = vpop.f32.mrf.mxu0
            %v1181 = vadd.f32 %v1162, %v1180
            %1182 = vdwg.mxu0
            %1183 = vst [vmem:[#allocation4] sm:$0xff] %v1181
          $region184: #{tpu_custom_call.1} parent=179 // pred_fallthru
            _
          %s1184 = scalar_lea.vmem [#allocation8], %s981
          %v1185 = vld [vmem:[%s1184] sm:$0xff]
          %s1186 = scalar_lea.vmem [#allocation11], %s981
          %v1187 = vld [vmem:[%s1186] sm:$0xff]
          %s1188 = scalar_lea.vmem [#allocation13], %s981
          %v1189 = vld [vmem:[%s1188] sm:$0xff]
          %s1190 = scalar_lea.vmem [#allocation18], %s981
          %v1191 = vld [vmem:[%s1190] sm:$0xff]
          %v1192 = vld [vmem:[#allocation26] sm:$0xff]
          %v1193 = vld [vmem:[#allocation26 + $0x8] sm:$0xff]
          %v1194 = vld [vmem:[#allocation26 + $0x10] sm:$0xff]
          %v1195 = vld [vmem:[#allocation26 + $0x18] sm:$0xff]
          %v1196 = vld [vmem:[#allocation26 + $0x20] sm:$0xff]
          %v1197 = vld [vmem:[#allocation26 + $0x28] sm:$0xff]
          %v1198 = vld [vmem:[#allocation26 + $0x30] sm:$0xff]
          %v1199 = vld [vmem:[#allocation26 + $0x38] sm:$0xff]
          %v1200 = vld [vmem:[#allocation26 + $0x40] sm:$0xff]
          %v1201 = vld [vmem:[#allocation26 + $0x48] sm:$0xff]
          %v1202 = vld [vmem:[#allocation26 + $0x50] sm:$0xff]
          %v1203 = vld [vmem:[#allocation26 + $0x58] sm:$0xff]
          %v1204 = vld [vmem:[#allocation26 + $0x60] sm:$0xff]
          %v1205 = vld [vmem:[#allocation26 + $0x68] sm:$0xff]
          %v1206 = vld [vmem:[#allocation26 + $0x70] sm:$0xff]
          %v1207 = vld [vmem:[#allocation26 + $0x78] sm:$0xff]
          %v1208 = vld [vmem:[#allocation26 + $0x80] sm:$0xff]
          %v1209 = vld [vmem:[#allocation26 + $0x88] sm:$0xff]
          %v1210 = vld [vmem:[#allocation26 + $0x90] sm:$0xff]
          %v1211 = vld [vmem:[#allocation26 + $0x98] sm:$0xff]
          %v1212 = vld [vmem:[#allocation26 + $0xa0] sm:$0xff]
          %v1213 = vld [vmem:[#allocation26 + $0xa8] sm:$0xff]
          %v1214 = vld [vmem:[#allocation26 + $0xb0] sm:$0xff]
          %v1215 = vld [vmem:[#allocation26 + $0xb8] sm:$0xff]
          %v1216 = vld [vmem:[#allocation26 + $0xc0] sm:$0xff]
          %v1217 = vld [vmem:[#allocation26 + $0xc8] sm:$0xff]
          %v1218 = vld [vmem:[#allocation26 + $0xd0] sm:$0xff]
          %v1219 = vld [vmem:[#allocation26 + $0xd8] sm:$0xff]
          %v1220 = vld [vmem:[#allocation26 + $0xe0] sm:$0xff]
          %v1221 = vld [vmem:[#allocation26 + $0xe8] sm:$0xff]
          %v1222 = vld [vmem:[#allocation26 + $0xf0] sm:$0xff]
          %v1223 = vld [vmem:[#allocation26 + $0xf8] sm:$0xff]
          %v1224 = vld [vmem:[#allocation26 + $0x100] sm:$0xff]
          %v1225 = vld [vmem:[#allocation26 + $0x108] sm:$0xff]
          %v1226 = vld [vmem:[#allocation26 + $0x110] sm:$0xff]
          %v1227 = vld [vmem:[#allocation26 + $0x118] sm:$0xff]
          %v1228 = vld [vmem:[#allocation26 + $0x120] sm:$0xff]
          %v1229 = vld [vmem:[#allocation26 + $0x128] sm:$0xff]
          %v1230 = vld [vmem:[#allocation26 + $0x130] sm:$0xff]
          %v1231 = vld [vmem:[#allocation26 + $0x138] sm:$0xff]
          %v1232 = vld [vmem:[#allocation26 + $0x140] sm:$0xff]
          %v1233 = vld [vmem:[#allocation26 + $0x148] sm:$0xff]
          %v1234 = vld [vmem:[#allocation26 + $0x150] sm:$0xff]
          %v1235 = vld [vmem:[#allocation26 + $0x158] sm:$0xff]
          %v1236 = vld [vmem:[#allocation26 + $0x160] sm:$0xff]
          %v1237 = vld [vmem:[#allocation26 + $0x168] sm:$0xff]
          %v1238 = vld [vmem:[#allocation26 + $0x170] sm:$0xff]
          %v1239 = vld [vmem:[#allocation26 + $0x178] sm:$0xff]
          %v1240 = vld [vmem:[#allocation26 + $0x180] sm:$0xff]
          %v1241 = vld [vmem:[#allocation26 + $0x188] sm:$0xff]
          %v1242 = vld [vmem:[#allocation26 + $0x190] sm:$0xff]
          %v1243 = vld [vmem:[#allocation26 + $0x198] sm:$0xff]
          %v1244 = vld [vmem:[#allocation26 + $0x1a0] sm:$0xff]
          %v1245 = vld [vmem:[#allocation26 + $0x1a8] sm:$0xff]
          %v1246 = vld [vmem:[#allocation26 + $0x1b0] sm:$0xff]
          %v1247 = vld [vmem:[#allocation26 + $0x1b8] sm:$0xff]
          %v1248 = vld [vmem:[#allocation26 + $0x1c0] sm:$0xff]
          %v1249 = vld [vmem:[#allocation26 + $0x1c8] sm:$0xff]
          %v1250 = vld [vmem:[#allocation26 + $0x1d0] sm:$0xff]
          %v1251 = vld [vmem:[#allocation26 + $0x1d8] sm:$0xff]
          %v1252 = vld [vmem:[#allocation26 + $0x1e0] sm:$0xff]
          %v1253 = vld [vmem:[#allocation26 + $0x1e8] sm:$0xff]
          %v1254 = vld [vmem:[#allocation26 + $0x1f0] sm:$0xff]
          %v1255 = vld [vmem:[#allocation26 + $0x1f8] sm:$0xff]
          %1256 = vmatpush.msra.mxu0 %v1252
          %1257 = vmatpush.msra.mxu0 %v1248
          %1258 = vmatpush.msra.mxu0 %v1244
          %1259 = vmatpush.msra.mxu0 %v1240
          %1260 = vmatpush.msra.mxu0 %v1236
          %1261 = vmatpush.msra.mxu0 %v1232
          %1262 = vmatpush.msra.mxu0 %v1228
          %1263 = vmatpush.msra.mxu0 %v1224
          %1264 = vmatpush.msra.mxu0 %v1220
          %1265 = vmatpush.msra.mxu0 %v1216
          %1266 = vmatpush.msra.mxu0 %v1212
          %1267 = vmatpush.msra.mxu0 %v1208
          %1268 = vmatpush.msra.mxu0 %v1204
          %1269 = vmatpush.msra.mxu0 %v1200
          %1270 = vmatpush.msra.mxu0 %v1196
          %1271 = vmatpush.msra.mxu0 %v1192
          %1272 = vmatmul.f32.gmra.mxu0 %v1191
          %v1273 = vpop.f32.mrf.mxu0
          %v1274 = vadd.f32 0.0, %v1273
          %1275 = vdwg.mxu0
          %1276 = vmatpush.msra.mxu0 %v1253
          %1277 = vmatpush.msra.mxu0 %v1249
          %1278 = vmatpush.msra.mxu0 %v1245
          %1279 = vmatpush.msra.mxu0 %v1241
          %1280 = vmatpush.msra.mxu0 %v1237
          %1281 = vmatpush.msra.mxu0 %v1233
          %1282 = vmatpush.msra.mxu0 %v1229
          %1283 = vmatpush.msra.mxu0 %v1225
          %1284 = vmatpush.msra.mxu0 %v1221
          %1285 = vmatpush.msra.mxu0 %v1217
          %1286 = vmatpush.msra.mxu0 %v1213
          %1287 = vmatpush.msra.mxu0 %v1209
          %1288 = vmatpush.msra.mxu0 %v1205
          %1289 = vmatpush.msra.mxu0 %v1201
          %1290 = vmatpush.msra.mxu0 %v1197
          %1291 = vmatpush.msra.mxu0 %v1193
          %1292 = vmatmul.f32.gmra.mxu0 %v1191
          %v1293 = vpop.f32.mrf.mxu0
          %v1294 = vadd.f32 0.0, %v1293
          %1295 = vdwg.mxu0
          %1296 = vmatpush.msra.mxu0 %v1254
          %1297 = vmatpush.msra.mxu0 %v1250
          %1298 = vmatpush.msra.mxu0 %v1246
          %1299 = vmatpush.msra.mxu0 %v1242
          %1300 = vmatpush.msra.mxu0 %v1238
          %1301 = vmatpush.msra.mxu0 %v1234
          %1302 = vmatpush.msra.mxu0 %v1230
          %1303 = vmatpush.msra.mxu0 %v1226
          %1304 = vmatpush.msra.mxu0 %v1222
          %1305 = vmatpush.msra.mxu0 %v1218
          %1306 = vmatpush.msra.mxu0 %v1214
          %1307 = vmatpush.msra.mxu0 %v1210
          %1308 = vmatpush.msra.mxu0 %v1206
          %1309 = vmatpush.msra.mxu0 %v1202
          %1310 = vmatpush.msra.mxu0 %v1198
          %1311 = vmatpush.msra.mxu0 %v1194
          %1312 = vmatmul.f32.gmra.mxu0 %v1191
          %v1313 = vpop.f32.mrf.mxu0
          %v1314 = vadd.f32 0.0, %v1313
          %1315 = vdwg.mxu0
          %1316 = vmatpush.msra.mxu0 %v1255
          %1317 = vmatpush.msra.mxu0 %v1251
          %1318 = vmatpush.msra.mxu0 %v1247
          %1319 = vmatpush.msra.mxu0 %v1243
          %1320 = vmatpush.msra.mxu0 %v1239
          %1321 = vmatpush.msra.mxu0 %v1235
          %1322 = vmatpush.msra.mxu0 %v1231
          %1323 = vmatpush.msra.mxu0 %v1227
          %1324 = vmatpush.msra.mxu0 %v1223
          %1325 = vmatpush.msra.mxu0 %v1219
          %1326 = vmatpush.msra.mxu0 %v1215
          %1327 = vmatpush.msra.mxu0 %v1211
          %1328 = vmatpush.msra.mxu0 %v1207
          %1329 = vmatpush.msra.mxu0 %v1203
          %1330 = vmatpush.msra.mxu0 %v1199
          %1331 = vmatpush.msra.mxu0 %v1195
          %1332 = vmatmul.f32.gmra.mxu0 %v1191
          %v1333 = vpop.f32.mrf.mxu0
          %v1334 = vadd.f32 0.0, %v1333
          %1335 = vdwg.mxu0
          %v1336 = vld [vmem:[#allocation14] sm:$0xff]
          %1338 = vset.pattern.permute.xlu0 0
          %1339 = vperm.xlu0 %1338, %v1336
          %v1340 = vpop.permute.xlu0 %1339
          %v1342 = vmul.f32 %v1340, %v1274
          %1343 = vset.pattern.permute.xlu0 1
          %1344 = vperm.xlu0 %1343, %v1336
          %v1345 = vpop.permute.xlu0 %1344
          %v1347 = vmul.f32 %v1345, %v1294
          %v1348 = vadd.f32 %v1342, %v1347
          %1349 = vset.pattern.permute.xlu0 2
          %1350 = vperm.xlu0 %1349, %v1336
          %v1351 = vpop.permute.xlu0 %1350
          %v1353 = vmul.f32 %v1351, %v1314
          %v1354 = vadd.f32 %v1348, %v1353
          %v1355 = vadd.f32 %v1354, %v1334
          %v1356 = vld [vmem:[#allocation5] sm:$0xff]
          %vm1357 = vcmask 64512
          %v1359 = vsel %vm1357, %v1185, 0
          %1361 = vmatpush.msra.mxu0 0.0
          %1362 = vmatpush.msra.mxu0 0.0
          %1363 = vmatpush.msra.mxu0 0.0
          %1364 = vmatpush.msra.mxu0 0.0
          %1365 = vmatpush.msra.mxu0 0.0
          %1366 = vmatpush.msra.mxu0 0.0
          %1367 = vmatpush.msra.mxu0 0.0
          %1368 = vmatpush.msra.mxu0 0.0
          %1369 = vmatpush.msra.mxu0 0.0
          %1370 = vmatpush.msra.mxu0 0.0
          %1371 = vmatpush.msra.mxu0 0.0
          %1372 = vmatpush.msra.mxu0 0.0
          %1373 = vmatpush.msra.mxu0 0.0
          %1374 = vmatpush.msra.mxu0 0.0
          %1375 = vmatpush.msra.mxu0 0.0
          %1376 = vmatpush.msra.mxu0 %v1356
          %1377 = vmatmul.f32.gmra.mxu0 %v1359
          %v1378 = vpop.f32.mrf.mxu0
          %v1379 = vadd.f32 0.0, %v1378
          %1380 = vdwg.mxu0
          %v1381 = vadd.f32 %v1355, %v1379
          %v1382 = vld [vmem:[#allocation6] sm:$0xff]
          %v1384 = vsel %vm1357, %v1187, 0
          %1386 = vmatpush.msra.mxu0 0.0
          %1387 = vmatpush.msra.mxu0 0.0
          %1388 = vmatpush.msra.mxu0 0.0
          %1389 = vmatpush.msra.mxu0 0.0
          %1390 = vmatpush.msra.mxu0 0.0
          %1391 = vmatpush.msra.mxu0 0.0
          %1392 = vmatpush.msra.mxu0 0.0
          %1393 = vmatpush.msra.mxu0 0.0
          %1394 = vmatpush.msra.mxu0 0.0
          %1395 = vmatpush.msra.mxu0 0.0
          %1396 = vmatpush.msra.mxu0 0.0
          %1397 = vmatpush.msra.mxu0 0.0
          %1398 = vmatpush.msra.mxu0 0.0
          %1399 = vmatpush.msra.mxu0 0.0
          %1400 = vmatpush.msra.mxu0 0.0
          %1401 = vmatpush.msra.mxu0 %v1382
          %1402 = vmatmul.f32.gmra.mxu0 %v1384
          %v1403 = vpop.f32.mrf.mxu0
          %v1404 = vadd.f32 0.0, %v1403
          %1405 = vdwg.mxu0
          %v1406 = vadd.f32 %v1381, %v1404
          %v1407 = vld [vmem:[#allocation7] sm:$0xff]
          %v1409 = vsel %vm1357, %v1189, 0
          %1411 = vmatpush.msra.mxu0 0.0
          %1412 = vmatpush.msra.mxu0 0.0
          %1413 = vmatpush.msra.mxu0 0.0
          %1414 = vmatpush.msra.mxu0 0.0
          %1415 = vmatpush.msra.mxu0 0.0
          %1416 = vmatpush.msra.mxu0 0.0
          %1417 = vmatpush.msra.mxu0 0.0
          %1418 = vmatpush.msra.mxu0 0.0
          %1419 = vmatpush.msra.mxu0 0.0
          %1420 = vmatpush.msra.mxu0 0.0
          %1421 = vmatpush.msra.mxu0 0.0
          %1422 = vmatpush.msra.mxu0 0.0
          %1423 = vmatpush.msra.mxu0 0.0
          %1424 = vmatpush.msra.mxu0 0.0
          %1425 = vmatpush.msra.mxu0 0.0
          %1426 = vmatpush.msra.mxu0 %v1407
          %1427 = vmatmul.f32.gmra.mxu0 %v1409
          %v1428 = vpop.f32.mrf.mxu0
          %v1429 = vadd.f32 0.0, %v1428
          %1430 = vdwg.mxu0
          %v1431 = vadd.f32 %v1406, %v1429
          %v1432 = vld [vmem:[%s839] sm:$0xff]
          %v1433 = vadd.f32 %v1431, %v1432
          %s1434 = scalar_lea.vmem [#allocation2], %s981
          %1435 = vst [vmem:[%s1434] sm:$0xff] %v1433
        $region180: #{tpu_custom_call.1} parent=99 // pred_fallthru
          _
        %p1436 = scmp.eq.s32.totalorder %s47, 1
        // Predicated region
        $region185: #{tpu_custom_call.1} parent=99 // pred_check
          %p1437 = pneg %p1436
        $region186: #{tpu_custom_call.1} parent=99 // pred_check_branch
          %1439 = sbr.rel (%p1437) target = $region188
        $region187: #{tpu_custom_call.1} parent=99 // pred_region
          %p1440 = scmp.eq.s32.totalorder %s48, 0
          // Predicated region
          $region189: #{tpu_custom_call.1} parent=187 // pred_check
            %p1441 = pneg %p1440
          $region190: #{tpu_custom_call.1} parent=187 // pred_check_branch
            %1443 = sbr.rel (%p1441) target = $region192
          $region191: #{tpu_custom_call.1} parent=187 // pred_region
            %v1444 = vld [vmem:[#allocation2] sm:$0xff]
            %v1445 = vld [vmem:[#allocation31] sm:$0xff]
            %v1446 = vld [vmem:[#allocation31 + $0x8] sm:$0xff]
            %v1447 = vld [vmem:[#allocation31 + $0x10] sm:$0xff]
            %v1448 = vld [vmem:[#allocation31 + $0x18] sm:$0xff]
            %v1449 = vld [vmem:[#allocation31 + $0x20] sm:$0xff]
            %v1450 = vld [vmem:[#allocation31 + $0x28] sm:$0xff]
            %v1451 = vld [vmem:[#allocation31 + $0x30] sm:$0xff]
            %v1452 = vld [vmem:[#allocation31 + $0x38] sm:$0xff]
            %v1453 = vld [vmem:[#allocation31 + $0x40] sm:$0xff]
            %v1454 = vld [vmem:[#allocation31 + $0x48] sm:$0xff]
            %v1455 = vld [vmem:[#allocation31 + $0x50] sm:$0xff]
            %v1456 = vld [vmem:[#allocation31 + $0x58] sm:$0xff]
            %v1457 = vld [vmem:[#allocation31 + $0x60] sm:$0xff]
            %v1458 = vld [vmem:[#allocation31 + $0x68] sm:$0xff]
            %v1459 = vld [vmem:[#allocation31 + $0x70] sm:$0xff]
            %v1460 = vld [vmem:[#allocation31 + $0x78] sm:$0xff]
            %1461 = vmatpush.msra.mxu0 %v1460
            %1462 = vmatpush.msra.mxu0 %v1459
            %1463 = vmatpush.msra.mxu0 %v1458
            %1464 = vmatpush.msra.mxu0 %v1457
            %1465 = vmatpush.msra.mxu0 %v1456
            %1466 = vmatpush.msra.mxu0 %v1455
            %1467 = vmatpush.msra.mxu0 %v1454
            %1468 = vmatpush.msra.mxu0 %v1453
            %1469 = vmatpush.msra.mxu0 %v1452
            %1470 = vmatpush.msra.mxu0 %v1451
            %1471 = vmatpush.msra.mxu0 %v1450
            %1472 = vmatpush.msra.mxu0 %v1449
            %1473 = vmatpush.msra.mxu0 %v1448
            %1474 = vmatpush.msra.mxu0 %v1447
            %1475 = vmatpush.msra.mxu0 %v1446
            %1476 = vmatpush.msra.mxu0 %v1445
            %1477 = vmatmul.f32.gmra.mxu0 %v1444
            %v1478 = vpop.f32.mrf.mxu0
            %v1479 = vadd.f32 0.0, %v1478
            %1480 = vdwg.mxu0
            %1481 = vst [vmem:[#allocation5] sm:$0xff] %v1479
            %v1482 = vld [vmem:[#allocation3] sm:$0xff]
            %v1483 = vld [vmem:[#allocation32] sm:$0xff]
            %v1484 = vld [vmem:[#allocation32 + $0x8] sm:$0xff]
            %v1485 = vld [vmem:[#allocation32 + $0x10] sm:$0xff]
            %v1486 = vld [vmem:[#allocation32 + $0x18] sm:$0xff]
            %v1487 = vld [vmem:[#allocation32 + $0x20] sm:$0xff]
            %v1488 = vld [vmem:[#allocation32 + $0x28] sm:$0xff]
            %v1489 = vld [vmem:[#allocation32 + $0x30] sm:$0xff]
            %v1490 = vld [vmem:[#allocation32 + $0x38] sm:$0xff]
            %v1491 = vld [vmem:[#allocation32 + $0x40] sm:$0xff]
            %v1492 = vld [vmem:[#allocation32 + $0x48] sm:$0xff]
            %v1493 = vld [vmem:[#allocation32 + $0x50] sm:$0xff]
            %v1494 = vld [vmem:[#allocation32 + $0x58] sm:$0xff]
            %v1495 = vld [vmem:[#allocation32 + $0x60] sm:$0xff]
            %v1496 = vld [vmem:[#allocation32 + $0x68] sm:$0xff]
            %v1497 = vld [vmem:[#allocation32 + $0x70] sm:$0xff]
            %v1498 = vld [vmem:[#allocation32 + $0x78] sm:$0xff]
            %1499 = vmatpush.msra.mxu0 %v1498
            %1500 = vmatpush.msra.mxu0 %v1497
            %1501 = vmatpush.msra.mxu0 %v1496
            %1502 = vmatpush.msra.mxu0 %v1495
            %1503 = vmatpush.msra.mxu0 %v1494
            %1504 = vmatpush.msra.mxu0 %v1493
            %1505 = vmatpush.msra.mxu0 %v1492
            %1506 = vmatpush.msra.mxu0 %v1491
            %1507 = vmatpush.msra.mxu0 %v1490
            %1508 = vmatpush.msra.mxu0 %v1489
            %1509 = vmatpush.msra.mxu0 %v1488
            %1510 = vmatpush.msra.mxu0 %v1487
            %1511 = vmatpush.msra.mxu0 %v1486
            %1512 = vmatpush.msra.mxu0 %v1485
            %1513 = vmatpush.msra.mxu0 %v1484
            %1514 = vmatpush.msra.mxu0 %v1483
            %1515 = vmatmul.f32.gmra.mxu0 %v1482
            %v1516 = vpop.f32.mrf.mxu0
            %v1517 = vadd.f32 0.0, %v1516
            %1518 = vdwg.mxu0
            %1519 = vst [vmem:[#allocation6] sm:$0xff] %v1517
            %v1520 = vld [vmem:[#allocation4] sm:$0xff]
            %v1521 = vld [vmem:[#allocation34] sm:$0xff]
            %v1522 = vld [vmem:[#allocation34 + $0x8] sm:$0xff]
            %v1523 = vld [vmem:[#allocation34 + $0x10] sm:$0xff]
            %v1524 = vld [vmem:[#allocation34 + $0x18] sm:$0xff]
            %v1525 = vld [vmem:[#allocation34 + $0x20] sm:$0xff]
            %v1526 = vld [vmem:[#allocation34 + $0x28] sm:$0xff]
            %v1527 = vld [vmem:[#allocation34 + $0x30] sm:$0xff]
            %v1528 = vld [vmem:[#allocation34 + $0x38] sm:$0xff]
            %v1529 = vld [vmem:[#allocation34 + $0x40] sm:$0xff]
            %v1530 = vld [vmem:[#allocation34 + $0x48] sm:$0xff]
            %v1531 = vld [vmem:[#allocation34 + $0x50] sm:$0xff]
            %v1532 = vld [vmem:[#allocation34 + $0x58] sm:$0xff]
            %v1533 = vld [vmem:[#allocation34 + $0x60] sm:$0xff]
            %v1534 = vld [vmem:[#allocation34 + $0x68] sm:$0xff]
            %v1535 = vld [vmem:[#allocation34 + $0x70] sm:$0xff]
            %v1536 = vld [vmem:[#allocation34 + $0x78] sm:$0xff]
            %1537 = vmatpush.msra.mxu0 %v1536
            %1538 = vmatpush.msra.mxu0 %v1535
            %1539 = vmatpush.msra.mxu0 %v1534
            %1540 = vmatpush.msra.mxu0 %v1533
            %1541 = vmatpush.msra.mxu0 %v1532
            %1542 = vmatpush.msra.mxu0 %v1531
            %1543 = vmatpush.msra.mxu0 %v1530
            %1544 = vmatpush.msra.mxu0 %v1529
            %1545 = vmatpush.msra.mxu0 %v1528
            %1546 = vmatpush.msra.mxu0 %v1527
            %1547 = vmatpush.msra.mxu0 %v1526
            %1548 = vmatpush.msra.mxu0 %v1525
            %1549 = vmatpush.msra.mxu0 %v1524
            %1550 = vmatpush.msra.mxu0 %v1523
            %1551 = vmatpush.msra.mxu0 %v1522
            %1552 = vmatpush.msra.mxu0 %v1521
            %1553 = vmatmul.f32.gmra.mxu0 %v1520
            %v1554 = vpop.f32.mrf.mxu0
            %v1555 = vadd.f32 0.0, %v1554
            %1556 = vdwg.mxu0
            %1557 = vst [vmem:[#allocation7] sm:$0xff] %v1555
          $region192: #{tpu_custom_call.1} parent=187 // pred_fallthru
            _
          %s1558 = scalar_lea.vmem [#allocation8], %s981
          %v1559 = vld [vmem:[%s1558] sm:$0xff]
          %s1560 = scalar_lea.vmem [#allocation11], %s981
          %v1561 = vld [vmem:[%s1560] sm:$0xff]
          %s1562 = scalar_lea.vmem [#allocation13], %s981
          %v1563 = vld [vmem:[%s1562] sm:$0xff]
          %s1564 = scalar_lea.vmem [#allocation2], %s981
          %v1565 = vld [vmem:[%s1564] sm:$0xff]
          %v1566 = vld [vmem:[#allocation35] sm:$0xff]
          %v1567 = vld [vmem:[#allocation35 + $0x8] sm:$0xff]
          %v1568 = vld [vmem:[#allocation35 + $0x10] sm:$0xff]
          %v1569 = vld [vmem:[#allocation35 + $0x18] sm:$0xff]
          %v1570 = vld [vmem:[#allocation35 + $0x20] sm:$0xff]
          %v1571 = vld [vmem:[#allocation35 + $0x28] sm:$0xff]
          %v1572 = vld [vmem:[#allocation35 + $0x30] sm:$0xff]
          %v1573 = vld [vmem:[#allocation35 + $0x38] sm:$0xff]
          %v1574 = vld [vmem:[#allocation35 + $0x40] sm:$0xff]
          %v1575 = vld [vmem:[#allocation35 + $0x48] sm:$0xff]
          %v1576 = vld [vmem:[#allocation35 + $0x50] sm:$0xff]
          %v1577 = vld [vmem:[#allocation35 + $0x58] sm:$0xff]
          %v1578 = vld [vmem:[#allocation35 + $0x60] sm:$0xff]
          %v1579 = vld [vmem:[#allocation35 + $0x68] sm:$0xff]
          %v1580 = vld [vmem:[#allocation35 + $0x70] sm:$0xff]
          %v1581 = vld [vmem:[#allocation35 + $0x78] sm:$0xff]
          %v1582 = vld [vmem:[#allocation35 + $0x80] sm:$0xff]
          %v1583 = vld [vmem:[#allocation35 + $0x88] sm:$0xff]
          %v1584 = vld [vmem:[#allocation35 + $0x90] sm:$0xff]
          %v1585 = vld [vmem:[#allocation35 + $0x98] sm:$0xff]
          %v1586 = vld [vmem:[#allocation35 + $0xa0] sm:$0xff]
          %v1587 = vld [vmem:[#allocation35 + $0xa8] sm:$0xff]
          %v1588 = vld [vmem:[#allocation35 + $0xb0] sm:$0xff]
          %v1589 = vld [vmem:[#allocation35 + $0xb8] sm:$0xff]
          %v1590 = vld [vmem:[#allocation35 + $0xc0] sm:$0xff]
          %v1591 = vld [vmem:[#allocation35 + $0xc8] sm:$0xff]
          %v1592 = vld [vmem:[#allocation35 + $0xd0] sm:$0xff]
          %v1593 = vld [vmem:[#allocation35 + $0xd8] sm:$0xff]
          %v1594 = vld [vmem:[#allocation35 + $0xe0] sm:$0xff]
          %v1595 = vld [vmem:[#allocation35 + $0xe8] sm:$0xff]
          %v1596 = vld [vmem:[#allocation35 + $0xf0] sm:$0xff]
          %v1597 = vld [vmem:[#allocation35 + $0xf8] sm:$0xff]
          %v1598 = vld [vmem:[#allocation35 + $0x100] sm:$0xff]
          %v1599 = vld [vmem:[#allocation35 + $0x108] sm:$0xff]
          %v1600 = vld [vmem:[#allocation35 + $0x110] sm:$0xff]
          %v1601 = vld [vmem:[#allocation35 + $0x118] sm:$0xff]
          %v1602 = vld [vmem:[#allocation35 + $0x120] sm:$0xff]
          %v1603 = vld [vmem:[#allocation35 + $0x128] sm:$0xff]
          %v1604 = vld [vmem:[#allocation35 + $0x130] sm:$0xff]
          %v1605 = vld [vmem:[#allocation35 + $0x138] sm:$0xff]
          %v1606 = vld [vmem:[#allocation35 + $0x140] sm:$0xff]
          %v1607 = vld [vmem:[#allocation35 + $0x148] sm:$0xff]
          %v1608 = vld [vmem:[#allocation35 + $0x150] sm:$0xff]
          %v1609 = vld [vmem:[#allocation35 + $0x158] sm:$0xff]
          %v1610 = vld [vmem:[#allocation35 + $0x160] sm:$0xff]
          %v1611 = vld [vmem:[#allocation35 + $0x168] sm:$0xff]
          %v1612 = vld [vmem:[#allocation35 + $0x170] sm:$0xff]
          %v1613 = vld [vmem:[#allocation35 + $0x178] sm:$0xff]
          %v1614 = vld [vmem:[#allocation35 + $0x180] sm:$0xff]
          %v1615 = vld [vmem:[#allocation35 + $0x188] sm:$0xff]
          %v1616 = vld [vmem:[#allocation35 + $0x190] sm:$0xff]
          %v1617 = vld [vmem:[#allocation35 + $0x198] sm:$0xff]
          %v1618 = vld [vmem:[#allocation35 + $0x1a0] sm:$0xff]
          %v1619 = vld [vmem:[#allocation35 + $0x1a8] sm:$0xff]
          %v1620 = vld [vmem:[#allocation35 + $0x1b0] sm:$0xff]
          %v1621 = vld [vmem:[#allocation35 + $0x1b8] sm:$0xff]
          %v1622 = vld [vmem:[#allocation35 + $0x1c0] sm:$0xff]
          %v1623 = vld [vmem:[#allocation35 + $0x1c8] sm:$0xff]
          %v1624 = vld [vmem:[#allocation35 + $0x1d0] sm:$0xff]
          %v1625 = vld [vmem:[#allocation35 + $0x1d8] sm:$0xff]
          %v1626 = vld [vmem:[#allocation35 + $0x1e0] sm:$0xff]
          %v1627 = vld [vmem:[#allocation35 + $0x1e8] sm:$0xff]
          %v1628 = vld [vmem:[#allocation35 + $0x1f0] sm:$0xff]
          %v1629 = vld [vmem:[#allocation35 + $0x1f8] sm:$0xff]
          %1630 = vmatpush.msra.mxu0 %v1626
          %1631 = vmatpush.msra.mxu0 %v1622
          %1632 = vmatpush.msra.mxu0 %v1618
          %1633 = vmatpush.msra.mxu0 %v1614
          %1634 = vmatpush.msra.mxu0 %v1610
          %1635 = vmatpush.msra.mxu0 %v1606
          %1636 = vmatpush.msra.mxu0 %v1602
          %1637 = vmatpush.msra.mxu0 %v1598
          %1638 = vmatpush.msra.mxu0 %v1594
          %1639 = vmatpush.msra.mxu0 %v1590
          %1640 = vmatpush.msra.mxu0 %v1586
          %1641 = vmatpush.msra.mxu0 %v1582
          %1642 = vmatpush.msra.mxu0 %v1578
          %1643 = vmatpush.msra.mxu0 %v1574
          %1644 = vmatpush.msra.mxu0 %v1570
          %1645 = vmatpush.msra.mxu0 %v1566
          %1646 = vmatmul.f32.gmra.mxu0 %v1565
          %v1647 = vpop.f32.mrf.mxu0
          %v1648 = vadd.f32 0.0, %v1647
          %1649 = vdwg.mxu0
          %1650 = vmatpush.msra.mxu0 %v1627
          %1651 = vmatpush.msra.mxu0 %v1623
          %1652 = vmatpush.msra.mxu0 %v1619
          %1653 = vmatpush.msra.mxu0 %v1615
          %1654 = vmatpush.msra.mxu0 %v1611
          %1655 = vmatpush.msra.mxu0 %v1607
          %1656 = vmatpush.msra.mxu0 %v1603
          %1657 = vmatpush.msra.mxu0 %v1599
          %1658 = vmatpush.msra.mxu0 %v1595
          %1659 = vmatpush.msra.mxu0 %v1591
          %1660 = vmatpush.msra.mxu0 %v1587
          %1661 = vmatpush.msra.mxu0 %v1583
          %1662 = vmatpush.msra.mxu0 %v1579
          %1663 = vmatpush.msra.mxu0 %v1575
          %1664 = vmatpush.msra.mxu0 %v1571
          %1665 = vmatpush.msra.mxu0 %v1567
          %1666 = vmatmul.f32.gmra.mxu0 %v1565
          %v1667 = vpop.f32.mrf.mxu0
          %v1668 = vadd.f32 0.0, %v1667
          %1669 = vdwg.mxu0
          %1670 = vmatpush.msra.mxu0 %v1628
          %1671 = vmatpush.msra.mxu0 %v1624
          %1672 = vmatpush.msra.mxu0 %v1620
          %1673 = vmatpush.msra.mxu0 %v1616
          %1674 = vmatpush.msra.mxu0 %v1612
          %1675 = vmatpush.msra.mxu0 %v1608
          %1676 = vmatpush.msra.mxu0 %v1604
          %1677 = vmatpush.msra.mxu0 %v1600
          %1678 = vmatpush.msra.mxu0 %v1596
          %1679 = vmatpush.msra.mxu0 %v1592
          %1680 = vmatpush.msra.mxu0 %v1588
          %1681 = vmatpush.msra.mxu0 %v1584
          %1682 = vmatpush.msra.mxu0 %v1580
          %1683 = vmatpush.msra.mxu0 %v1576
          %1684 = vmatpush.msra.mxu0 %v1572
          %1685 = vmatpush.msra.mxu0 %v1568
          %1686 = vmatmul.f32.gmra.mxu0 %v1565
          %v1687 = vpop.f32.mrf.mxu0
          %v1688 = vadd.f32 0.0, %v1687
          %1689 = vdwg.mxu0
          %1690 = vmatpush.msra.mxu0 %v1629
          %1691 = vmatpush.msra.mxu0 %v1625
          %1692 = vmatpush.msra.mxu0 %v1621
          %1693 = vmatpush.msra.mxu0 %v1617
          %1694 = vmatpush.msra.mxu0 %v1613
          %1695 = vmatpush.msra.mxu0 %v1609
          %1696 = vmatpush.msra.mxu0 %v1605
          %1697 = vmatpush.msra.mxu0 %v1601
          %1698 = vmatpush.msra.mxu0 %v1597
          %1699 = vmatpush.msra.mxu0 %v1593
          %1700 = vmatpush.msra.mxu0 %v1589
          %1701 = vmatpush.msra.mxu0 %v1585
          %1702 = vmatpush.msra.mxu0 %v1581
          %1703 = vmatpush.msra.mxu0 %v1577
          %1704 = vmatpush.msra.mxu0 %v1573
          %1705 = vmatpush.msra.mxu0 %v1569
          %1706 = vmatmul.f32.gmra.mxu0 %v1565
          %v1707 = vpop.f32.mrf.mxu0
          %v1708 = vadd.f32 0.0, %v1707
          %1709 = vdwg.mxu0
          %v1710 = vld [vmem:[#allocation14] sm:$0xff]
          %1712 = vset.pattern.permute.xlu0 0
          %1713 = vperm.xlu0 %1712, %v1710
          %v1714 = vpop.permute.xlu0 %1713
          %v1716 = vmul.f32 %v1714, %v1648
          %1717 = vset.pattern.permute.xlu0 1
          %1718 = vperm.xlu0 %1717, %v1710
          %v1719 = vpop.permute.xlu0 %1718
          %v1721 = vmul.f32 %v1719, %v1668
          %v1722 = vadd.f32 %v1716, %v1721
          %1723 = vset.pattern.permute.xlu0 2
          %1724 = vperm.xlu0 %1723, %v1710
          %v1725 = vpop.permute.xlu0 %1724
          %v1727 = vmul.f32 %v1725, %v1688
          %v1728 = vadd.f32 %v1722, %v1727
          %v1729 = vadd.f32 %v1728, %v1708
          %v1730 = vld [vmem:[#allocation5] sm:$0xff]
          %vm1731 = vcmask 64512
          %v1733 = vsel %vm1731, %v1559, 0
          %1735 = vmatpush.msra.mxu0 0.0
          %1736 = vmatpush.msra.mxu0 0.0
          %1737 = vmatpush.msra.mxu0 0.0
          %1738 = vmatpush.msra.mxu0 0.0
          %1739 = vmatpush.msra.mxu0 0.0
          %1740 = vmatpush.msra.mxu0 0.0
          %1741 = vmatpush.msra.mxu0 0.0
          %1742 = vmatpush.msra.mxu0 0.0
          %1743 = vmatpush.msra.mxu0 0.0
          %1744 = vmatpush.msra.mxu0 0.0
          %1745 = vmatpush.msra.mxu0 0.0
          %1746 = vmatpush.msra.mxu0 0.0
          %1747 = vmatpush.msra.mxu0 0.0
          %1748 = vmatpush.msra.mxu0 0.0
          %1749 = vmatpush.msra.mxu0 0.0
          %1750 = vmatpush.msra.mxu0 %v1730
          %1751 = vmatmul.f32.gmra.mxu0 %v1733
          %v1752 = vpop.f32.mrf.mxu0
          %v1753 = vadd.f32 0.0, %v1752
          %1754 = vdwg.mxu0
          %v1755 = vadd.f32 %v1729, %v1753
          %v1756 = vld [vmem:[#allocation6] sm:$0xff]
          %v1758 = vsel %vm1731, %v1561, 0
          %1760 = vmatpush.msra.mxu0 0.0
          %1761 = vmatpush.msra.mxu0 0.0
          %1762 = vmatpush.msra.mxu0 0.0
          %1763 = vmatpush.msra.mxu0 0.0
          %1764 = vmatpush.msra.mxu0 0.0
          %1765 = vmatpush.msra.mxu0 0.0
          %1766 = vmatpush.msra.mxu0 0.0
          %1767 = vmatpush.msra.mxu0 0.0
          %1768 = vmatpush.msra.mxu0 0.0
          %1769 = vmatpush.msra.mxu0 0.0
          %1770 = vmatpush.msra.mxu0 0.0
          %1771 = vmatpush.msra.mxu0 0.0
          %1772 = vmatpush.msra.mxu0 0.0
          %1773 = vmatpush.msra.mxu0 0.0
          %1774 = vmatpush.msra.mxu0 0.0
          %1775 = vmatpush.msra.mxu0 %v1756
          %1776 = vmatmul.f32.gmra.mxu0 %v1758
          %v1777 = vpop.f32.mrf.mxu0
          %v1778 = vadd.f32 0.0, %v1777
          %1779 = vdwg.mxu0
          %v1780 = vadd.f32 %v1755, %v1778
          %v1781 = vld [vmem:[#allocation7] sm:$0xff]
          %v1783 = vsel %vm1731, %v1563, 0
          %1785 = vmatpush.msra.mxu0 0.0
          %1786 = vmatpush.msra.mxu0 0.0
          %1787 = vmatpush.msra.mxu0 0.0
          %1788 = vmatpush.msra.mxu0 0.0
          %1789 = vmatpush.msra.mxu0 0.0
          %1790 = vmatpush.msra.mxu0 0.0
          %1791 = vmatpush.msra.mxu0 0.0
          %1792 = vmatpush.msra.mxu0 0.0
          %1793 = vmatpush.msra.mxu0 0.0
          %1794 = vmatpush.msra.mxu0 0.0
          %1795 = vmatpush.msra.mxu0 0.0
          %1796 = vmatpush.msra.mxu0 0.0
          %1797 = vmatpush.msra.mxu0 0.0
          %1798 = vmatpush.msra.mxu0 0.0
          %1799 = vmatpush.msra.mxu0 0.0
          %1800 = vmatpush.msra.mxu0 %v1781
          %1801 = vmatmul.f32.gmra.mxu0 %v1783
          %v1802 = vpop.f32.mrf.mxu0
          %v1803 = vadd.f32 0.0, %v1802
          %1804 = vdwg.mxu0
          %v1805 = vadd.f32 %v1780, %v1803
          %v1806 = vld [vmem:[%s849] sm:$0xff]
          %v1807 = vadd.f32 %v1805, %v1806
          %1808 = vst [vmem:[%s976] sm:$0xff] %v1807
        $region188: #{tpu_custom_call.1} parent=99 // pred_fallthru
          _
        %s1809 = sand.u32 %s506, 1
        %s1810 = scalar_lea.sflag [#allocation10], %s1809
        %s1811 = sand.u32 %s506, 1
        %s1812 = smul.addr %s1811, 8
        %s1813 = scalar_lea.vmem [#allocation37], %s1812
        // Predicated region
        $region193: #{tpu_custom_call.1} parent=99 // pred_check
          %p1814 = pneg %p516
        $region194: #{tpu_custom_call.1} parent=99 // pred_check_branch
          %1816 = sbr.rel (%p1814) target = $region196
        $region195: #{tpu_custom_call.1} parent=99 // pred_region
          %s1817 = smul.u32 %s48, %s47
          %1819 = vsyncadd %s1810, 0
          %s1820 = smul.addr %s1817, 8
          %s1821 = scalar_lea.hbm %s20, %s1820
          %s1823 = sshll.u32 %s1813, 4
          %s1824 = int_to_ptr.vmem [resolvable:$true] %s1823
          %s1825 = sshll.u32 %s1821, 4
          %s1826 = int_to_ptr.hbm [resolvable:$true] %s1825
          %1828 = dma.vmem_to_hbm [thread:$0]  %s1824, 128, %s1826, %s1810
        $region196: #{tpu_custom_call.1} parent=99 // pred_fallthru
          _
      $region100: #{tpu_custom_call.1} parent=5 // pred_fallthru
        _
      %p1829 = scmp.le.s32.totalorder 2, %s38
      // Predicated region
      $region197: #{tpu_custom_call.1} parent=5 // pred_check
        %p1830 = pneg %p1829
      $region198: #{tpu_custom_call.1} parent=5 // pred_check_branch
        %1832 = sbr.rel (%p1830) target = $region200
      $region199: #{tpu_custom_call.1} parent=5 // pred_region
        %s1833 = ssub.s32 %s38, 2
        // Predicated region
        $region201: #{tpu_custom_call.1} parent=199 // pred_check
          %p1834 = pneg %p522
        $region202: #{tpu_custom_call.1} parent=199 // pred_check_branch
          %1836 = sbr.rel (%p1834) target = $region204
        $region203: #{tpu_custom_call.1} parent=199 // pred_region
          %s1837 = sand.u32 %s507, 1
          %s1838 = scalar_lea.sflag [#allocation10], %s1837
          %s1839 = sand.u32 %s507, 1
          %s1840 = smul.addr %s1839, 8
          %s1841 = scalar_lea.vmem [#allocation37], %s1840
          %1843 = dma.done %s1838, 128
        $region204: #{tpu_custom_call.1} parent=199 // pred_fallthru
          _
      $region200: #{tpu_custom_call.1} parent=5 // pred_fallthru
        _
    $region6: #{tpu_custom_call.1} parent=1 // loop_footer
      %s42 = sadd.s32 1, %s38
    $region7: #{tpu_custom_call.1} parent=1 // loop_footer_branch
      %37 = sbr.rel target = $region3
    $region8: #{tpu_custom_call.1} parent=1 // loop_exit
      _
    %1844 = vsyncpa [#allocation9], 1
    %s1845 = scalar_lea.sflag [#allocation9], 1
    %1846 = vsyncpa %s1845, 1
    %1847 = vsyncpa [#allocation12], 1
    %1848 = vsyncpa [#allocation15], 1
    %1849 = vsyncpa [#allocation21], 1
    %1850 = vsyncpa [#allocation24], 1
    %1851 = vsyncpa [#allocation27], 1
    %1852 = vsyncpa [#allocation30], 1
    %1853 = vsyncpa [#allocation33], 1
    %1854 = vsyncpa [#allocation36], 1
    %1855 = vsyncpa [#allocation10], 1
    %s1856 = scalar_lea.sflag [#allocation10], 1
    %1857 = vsyncpa %s1856, 1

</llo_original>
